<compile_context>
chip_gen: v7x
topology: tpu7x:2x2x1
jax: 0.10.0
libtpu: 0.0.40
codegen_flags: <defaults>
</compile_context>

<pallas_src>
import math

import jax
import jax.numpy as jnp
from jax.experimental import pallas as pl
from jax.experimental.pallas import tpu as pltpu

# ---- "Phi3Config"-style hyperparameters (small, synthetic) ----
BATCH = 2
SEQ = 8
HIDDEN = 32
N_HEADS = 4
N_KV_HEADS = 2
HEAD_DIM = HIDDEN // N_HEADS          # 8
INTERMEDIATE = 64
RMS_EPS = 1e-6
ROPE_THETA = 10000.0
OP_SIZE = N_HEADS * HEAD_DIM + 2 * N_KV_HEADS * HEAD_DIM  # fused qkv out dim

NEG_BIG = -1e30   # finite large-negative mask (robust if rows ever fully mask)


def _rms_norm(x, w, eps):
    # matches Phi3RMSNorm: fp32 mean of squares over last dim, rsqrt, scale
    var = jnp.mean(x * x, axis=-1, keepdims=True)
    return (x * jax.lax.rsqrt(var + eps)) * w


def phi3_decoder_layer_kernel(x_ref, wqkv_ref, wo_ref, wgu_ref, wd_ref,
                              ln1_ref, ln2_ref, cos_ref, sin_ref, mask_ref,
                              out_ref):
    # All hyperparameters derived from ref shapes (no silent mismatch).
    T, H = x_ref.shape
    D = cos_ref.shape[-1]
    q_dim = wo_ref.shape[0]                    # n_heads * head_dim
    n_heads = q_dim // D
    op_size = wqkv_ref.shape[-1]
    n_kv = (op_size - q_dim) // (2 * D)
    group = n_heads // n_kv
    kv_dim = n_kv * D
    inter = wd_ref.shape[0]
    half = D // 2

    x = x_ref[...]                             # (T, H) fp32, residual path

    # ---- input_layernorm (fp32 elementwise) ----
    normed = _rms_norm(x, ln1_ref[...], RMS_EPS)

    # ---- self_attn: fused QKV projection (bf16 operands, fp32 accumulate).
    # The 1/sqrt(head_dim) attention scale is pre-folded into the Q columns
    # of wqkv on the host.
    qkv = jnp.dot(normed.astype(jnp.bfloat16), wqkv_ref[...],
                  preferred_element_type=jnp.float32)       # (T, op_size)

    q_slab = qkv[:, :q_dim]                     # (T, n_heads*D)
    k_slab = qkv[:, q_dim:q_dim + kv_dim]       # (T, n_kv*D)
    v_slab = qkv[:, q_dim + kv_dim:]            # (T, n_kv*D)

    # ---- RoPE (fp32): sign of rotate_half is folded into the sin table, so
    # the rotation is a plain unsigned half-swap. Applied once per slab.
    cos = cos_ref[...]                          # (T, D)
    sin = sin_ref[...]                          # (T, D), already sign-folded

    def rope_heads(slab, n):
        # (T, n*D) -> head-major (n, T, D) once, then rotate + apply tables.
        t = jnp.swapaxes(slab.reshape(T, n, D), 0, 1)        # (n, T, D)
        # TODO(synk): at production head_dim (128-multiple) replace the concat
        # with pltpu.roll(t, shift=half, axis=-1) (XLU slot, free-ish).
        rot = jnp.concatenate([t[..., half:], t[..., :half]], axis=-1)
        return t * cos[None] + rot * sin[None]

    q_h = rope_heads(q_slab, n_heads)                        # (n_heads, T, D)
    k_h = rope_heads(k_slab, n_kv)                           # (n_kv,    T, D)
    v_h = jnp.swapaxes(v_slab.reshape(T, n_kv, D), 0, 1)     # (n_kv,    T, D)

    # ---- causal GQA attention: ONE batched einsum per contraction.
    # kv-head is the (leading) batch axis; the `group` query heads sharing a
    # kv head are folded into the query-row axis (contiguous reshape).
    q_g = q_h.reshape(n_kv, group * T, D).astype(jnp.bfloat16)
    k_g = k_h.astype(jnp.bfloat16)
    scores = jnp.einsum('bqd,bkd->bqk', q_g, k_g,
                        preferred_element_type=jnp.float32)  # (n_kv, g*T, T)
    scores = scores + mask_ref[...][None]       # host-built block-diag causal

    m = jnp.max(scores, axis=-1, keepdims=True)
    e = jnp.exp(scores - m)
    l = jnp.sum(e, axis=-1, keepdims=True)
    p = e * pl.reciprocal(l, approx=True)       # EUP reciprocal, divide-free

    attn_g = jnp.einsum('bqk,bkd->bqd', p.astype(jnp.bfloat16),
                        v_h.astype(jnp.bfloat16),
                        preferred_element_type=jnp.float32)  # (n_kv, g*T, D)

    # Back to token-major (T, n_heads*D) with a single small transpose.
    attn = jnp.swapaxes(attn_g.reshape(n_heads, T, D), 0, 1).reshape(T, q_dim)

    attn_out = jnp.dot(attn.astype(jnp.bfloat16), wo_ref[...],
                       preferred_element_type=jnp.float32)   # (T, H)

    # residual (+ resid_attn_dropout == identity at inference)
    hidden = x + attn_out

    # ---- post_attention_layernorm + SiLU-gated MLP ----
    normed2 = _rms_norm(hidden, ln2_ref[...], RMS_EPS)
    gu = jnp.dot(normed2.astype(jnp.bfloat16), wgu_ref[...],
                 preferred_element_type=jnp.float32)         # (T, 2*inter)
    gate = gu[:, :inter]
    up = gu[:, inter:]
    act = up * (gate * jax.nn.sigmoid(gate))                 # fp32 elementwise
    mlp_out = jnp.dot(act.astype(jnp.bfloat16), wd_ref[...],
                      preferred_element_type=jnp.float32)

    # residual (+ resid_mlp_dropout == identity at inference)
    out_ref[...] = hidden + mlp_out


@jax.jit
def phi3_decoder_layer(x, wqkv, wo, wgu, wd, ln1, ln2, cos, sin):
    B, S, H = x.shape
    D = cos.shape[-1]
    q_dim = wo.shape[0]
    n_heads = q_dim // D
    op_size = wqkv.shape[-1]
    n_kv = (op_size - q_dim) // (2 * D)
    group = n_heads // n_kv
    inter = wd.shape[0]
    T = B * S
    half = D // 2
    scale = 1.0 / math.sqrt(D)

    # ---- host-side prep (free XLA work, not kernel cycles) ----
    # Fold attention scale into the Q columns of the fused QKV weight, then
    # cast all weights to bf16 (fp32 accumulation stays in the kernel).
    # TODO(synk): for production weights go int8 (v5e/v6e) / fp8 (v7x) with
    #             per-channel dequant scales applied post-GEMM.
    col_scale = jnp.concatenate(
        [jnp.full((q_dim,), scale, jnp.float32),
         jnp.ones((op_size - q_dim,), jnp.float32)])
    wqkv_bf = (wqkv * col_scale[None, :]).astype(jnp.bfloat16)
    wo_bf = wo.astype(jnp.bfloat16)
    wgu_bf = wgu.astype(jnp.bfloat16)
    wd_bf = wd.astype(jnp.bfloat16)

    # Flatten tokens (batch folded into the row/sublane axis).
    x2 = x.reshape(T, H).astype(jnp.float32)

    # Per-token RoPE tables; rotate_half sign folded into the sin table.
    cos_t = jnp.tile(cos.astype(jnp.float32), (B, 1))                # (T, D)
    s_half = sin[:, :half].astype(jnp.float32)
    sin_t = jnp.tile(jnp.concatenate([-s_half, s_half], -1), (B, 1))  # (T, D)

    # Block-diagonal causal additive mask over flattened tokens, tiled over
    # the GQA group axis (query rows are ordered group-major, token-minor).
    t_idx = jnp.arange(T)
    same_batch = (t_idx[:, None] // S) == (t_idx[None, :] // S)
    causal = (t_idx[:, None] % S) >= (t_idx[None, :] % S)
    mask = jnp.where(same_batch & causal, 0.0, NEG_BIG).astype(jnp.float32)
    mask_g = jnp.tile(mask, (group, 1))                       # (group*T, T)

    ln1_r = ln1.reshape(1, H).astype(jnp.float32)
    ln2_r = ln2.reshape(1, H).astype(jnp.float32)

    flops = 2 * T * H * op_size                       # qkv proj
    flops += 2 * 2 * n_heads * T * T * D              # scores + p@v (masked)
    flops += 2 * T * q_dim * H                        # o_proj
    flops += 2 * T * H * (2 * inter)                  # gate_up proj
    flops += 2 * T * inter * H                        # down proj
    transcendentals = n_heads * T * T + T * inter + 2 * T
    bytes_accessed = (4 * (2 * x2.size + ln1_r.size + ln2_r.size +
                           2 * cos_t.size + mask_g.size) +
                      2 * (wqkv_bf.size + wo_bf.size + wgu_bf.size + wd_bf.size))

    out2 = pl.pallas_call(
        phi3_decoder_layer_kernel,
        out_shape=jax.ShapeDtypeStruct((T, H), jnp.float32),
        # Single invocation (no grid): toy problem + bf16 weights live in VMEM.
        in_specs=[pl.BlockSpec(memory_space=pltpu.MemorySpace.VMEM)] * 10,
        out_specs=pl.BlockSpec(memory_space=pltpu.MemorySpace.VMEM),
        compiler_params=pltpu.CompilerParams(vmem_limit_bytes=32 * 1024 * 1024),
        cost_estimate=pl.CostEstimate(flops=flops,
                                      transcendentals=transcendentals,
                                      bytes_accessed=bytes_accessed),
    )(x2, wqkv_bf, wo_bf, wgu_bf, wd_bf, ln1_r, ln2_r, cos_t, sin_t, mask_g)

    return out2.reshape(B, S, H)


# ---- pure-JAX fp32 reference (same math as the PyTorch module) ----
def _reference(x, wqkv, wo, wgu, wd, ln1, ln2, cos, sin):
    def rms(t, w):
        var = jnp.mean(t * t, axis=-1, keepdims=True)
        return t * jax.lax.rsqrt(var + RMS_EPS) * w

    n1 = rms(x, ln1)
    qkv = n1 @ wqkv
    q = qkv[..., : N_HEADS * HEAD_DIM]
    k = qkv[..., N_HEADS * HEAD_DIM: N_HEADS * HEAD_DIM + N_KV_HEADS * HEAD_DIM]
    v = qkv[..., N_HEADS * HEAD_DIM + N_KV_HEADS * HEAD_DIM:]
    B, S, _ = x.shape
    q = q.reshape(B, S, N_HEADS, HEAD_DIM).transpose(0, 2, 1, 3)
    k = k.reshape(B, S, N_KV_HEADS, HEAD_DIM).transpose(0, 2, 1, 3)
    v = v.reshape(B, S, N_KV_HEADS, HEAD_DIM).transpose(0, 2, 1, 3)

    def rope(t):
        half = HEAD_DIM // 2
        rot = jnp.concatenate([-t[..., half:], t[..., :half]], axis=-1)
        return t * cos[None, None] + rot * sin[None, None]

    q, k = rope(q), rope(k)
    rep = N_HEADS // N_KV_HEADS
    k = jnp.repeat(k, rep, axis=1)
    v = jnp.repeat(v, rep, axis=1)
    scores = jnp.einsum("bhqd,bhkd->bhqk", q, k) / math.sqrt(HEAD_DIM)
    mask = jnp.tril(jnp.ones((S, S), bool))
    scores = jnp.where(mask, scores, -jnp.inf)
    p = jax.nn.softmax(scores, axis=-1)
    attn = jnp.einsum("bhqk,bhkd->bhqd", p, v).transpose(0, 2, 1, 3).reshape(B, S, -1)
    hidden = x + attn @ wo
    n2 = rms(hidden, ln2)
    gu = n2 @ wgu
    gate, up = gu[..., :INTERMEDIATE], gu[..., INTERMEDIATE:]
    return hidden + (up * jax.nn.silu(gate)) @ wd


if __name__ == "__main__":
    key = jax.random.PRNGKey(0)
    k_x, k_qkv, k_o, k_gu, k_d = jax.random.split(key, 5)

    x = jax.random.normal(k_x, (BATCH, SEQ, HIDDEN), dtype=jnp.float32)

    # deterministic synthetic weights (Phi3 Linear layers have no bias)
    wqkv = 0.02 * jax.random.normal(k_qkv, (HIDDEN, OP_SIZE), dtype=jnp.float32)
    wo = 0.02 * jax.random.normal(k_o, (N_HEADS * HEAD_DIM, HIDDEN), dtype=jnp.float32)
    wgu = 0.02 * jax.random.normal(k_gu, (HIDDEN, 2 * INTERMEDIATE), dtype=jnp.float32)
    wd = 0.02 * jax.random.normal(k_d, (INTERMEDIATE, HIDDEN), dtype=jnp.float32)
    ln1 = jnp.ones((HIDDEN,), dtype=jnp.float32)     # Phi3RMSNorm inits weight=1
    ln2 = jnp.ones((HIDDEN,), dtype=jnp.float32)

    # rotary tables for position_ids = arange(SEQ)
    pos = jnp.arange(SEQ, dtype=jnp.float32)
    inv_freq = 1.0 / (ROPE_THETA ** (jnp.arange(0, HEAD_DIM, 2, dtype=jnp.float32) / HEAD_DIM))
    freqs = pos[:, None] * inv_freq[None, :]
    emb = jnp.concatenate([freqs, freqs], axis=-1)
    cos, sin = jnp.cos(emb), jnp.sin(emb)

    out = phi3_decoder_layer(x, wqkv, wo, wgu, wd, ln1, ln2, cos, sin)
    out = jax.block_until_ready(out)

    ref = jax.block_until_ready(_reference(x, wqkv, wo, wgu, wd, ln1, ln2, cos, sin))
    assert out.shape == (BATCH, SEQ, HIDDEN)
    # bf16 GEMMs + approx reciprocal vs fp32 reference -> slightly looser tol.
    assert jnp.allclose(out, ref, atol=3e-3, rtol=3e-3), "mismatch vs reference"

    print("KERNEL_OK")
</pallas_src>

<mosaic_0001>
module attributes {stable_mosaic.version = 11 : i64} {
  func.func @phi3_decoder_layer_kernel(%arg0: memref<16x32xf32, #tpu.memory_space<vmem>>, %arg1: memref<32x64xbf16, #tpu.memory_space<vmem>>, %arg2: memref<32x32xbf16, #tpu.memory_space<vmem>>, %arg3: memref<32x128xbf16, #tpu.memory_space<vmem>>, %arg4: memref<64x32xbf16, #tpu.memory_space<vmem>>, %arg5: memref<1x32xf32, #tpu.memory_space<vmem>>, %arg6: memref<1x32xf32, #tpu.memory_space<vmem>>, %arg7: memref<16x8xf32, #tpu.memory_space<vmem>>, %arg8: memref<16x8xf32, #tpu.memory_space<vmem>>, %arg9: memref<32x16xf32, #tpu.memory_space<vmem>>, %arg10: memref<16x32xf32, #tpu.memory_space<vmem>>) attributes {dimension_semantics = [], scalar_prefetch = 0 : i64, scratch_operands = 0 : i64, tpu.core_type = #tpu.core_type<tc>} {
    %c0 = arith.constant 0 : index
    %c0_0 = arith.constant 0 : index
    %0 = vector.load %arg0[%c0, %c0_0] : memref<16x32xf32, #tpu.memory_space<vmem>>, vector<16x32xf32>
    %c0_1 = arith.constant 0 : index
    %c0_2 = arith.constant 0 : index
    %1 = vector.load %arg5[%c0_1, %c0_2] : memref<1x32xf32, #tpu.memory_space<vmem>>, vector<1x32xf32>
    %2 = arith.mulf %0, %0 : vector<16x32xf32>
    %cst = arith.constant dense<0.000000e+00> : vector<16xf32>
    %3 = vector.multi_reduction <add>, %2, %cst [1] : vector<16x32xf32> to vector<16xf32>
    %4 = vector.shape_cast %3 : vector<16xf32> to vector<16x1xf32>
    %cst_3 = arith.constant 3.200000e+01 : f32
    %5 = vector.broadcast %cst_3 : f32 to vector<16x1xf32>
    %6 = arith.divf %4, %5 : vector<16x1xf32>
    %cst_4 = arith.constant 9.99999997E-7 : f32
    %7 = vector.broadcast %cst_4 : f32 to vector<16x1xf32>
    %8 = arith.addf %6, %7 : vector<16x1xf32>
    %9 = math.rsqrt %8 : vector<16x1xf32>
    %10 = vector.broadcast %9 : vector<16x1xf32> to vector<16x32xf32>
    %11 = arith.mulf %0, %10 : vector<16x32xf32>
    %12 = vector.broadcast %1 : vector<1x32xf32> to vector<16x32xf32>
    %13 = arith.mulf %11, %12 : vector<16x32xf32>
    %14 = arith.truncf %13 : vector<16x32xf32> to vector<16x32xbf16>
    %c0_5 = arith.constant 0 : index
    %c0_6 = arith.constant 0 : index
    %15 = vector.load %arg1[%c0_5, %c0_6] : memref<32x64xbf16, #tpu.memory_space<vmem>>, vector<32x64xbf16>
    %cst_7 = arith.constant dense<0.000000e+00> : vector<16x64xf32>
    %16 = tpu.matmul %14, %15, %cst_7 {dimension_numbers = #tpu.dot_dimension_numbers<[1], [0], [0], [1], [0, 0, 1, 1], [], []>} : vector<16x32xbf16>, vector<32x64xbf16>, vector<16x64xf32> -> vector<16x64xf32>
    %17 = vector.extract_strided_slice %16 {offsets = [0, 0], sizes = [16, 32], strides = [1, 1]} : vector<16x64xf32> to vector<16x32xf32>
    %18 = vector.extract_strided_slice %16 {offsets = [0, 32], sizes = [16, 16], strides = [1, 1]} : vector<16x64xf32> to vector<16x16xf32>
    %19 = vector.extract_strided_slice %16 {offsets = [0, 48], sizes = [16, 16], strides = [1, 1]} : vector<16x64xf32> to vector<16x16xf32>
    %c0_8 = arith.constant 0 : index
    %c0_9 = arith.constant 0 : index
    %20 = vector.load %arg7[%c0_8, %c0_9] : memref<16x8xf32, #tpu.memory_space<vmem>>, vector<16x8xf32>
    %c0_10 = arith.constant 0 : index
    %c0_11 = arith.constant 0 : index
    %21 = vector.load %arg8[%c0_10, %c0_11] : memref<16x8xf32, #tpu.memory_space<vmem>>, vector<16x8xf32>
    %22 = vector.shape_cast %17 : vector<16x32xf32> to vector<16x4x8xf32>
    %23 = tpu.transpose %22, [1, 0, 2] : vector<16x4x8xf32> -> vector<4x16x8xf32>
    %24 = vector.extract_strided_slice %23 {offsets = [0, 0, 4], sizes = [4, 16, 4], strides = [1, 1, 1]} : vector<4x16x8xf32> to vector<4x16x4xf32>
    %25 = vector.extract_strided_slice %23 {offsets = [0, 0, 0], sizes = [4, 16, 4], strides = [1, 1, 1]} : vector<4x16x8xf32> to vector<4x16x4xf32>
    %26 = tpu.concatenate %24, %25 in 2 : vector<4x16x4xf32>, vector<4x16x4xf32> -> vector<4x16x8xf32>
    %27 = vector.shape_cast %20 : vector<16x8xf32> to vector<1x16x8xf32>
    %28 = vector.broadcast %27 : vector<1x16x8xf32> to vector<4x16x8xf32>
    %29 = arith.mulf %23, %28 : vector<4x16x8xf32>
    %30 = vector.shape_cast %21 : vector<16x8xf32> to vector<1x16x8xf32>
    %31 = vector.broadcast %30 : vector<1x16x8xf32> to vector<4x16x8xf32>
    %32 = arith.mulf %26, %31 : vector<4x16x8xf32>
    %33 = arith.addf %29, %32 : vector<4x16x8xf32>
    %34 = vector.shape_cast %18 : vector<16x16xf32> to vector<16x2x8xf32>
    %35 = tpu.transpose %34, [1, 0, 2] : vector<16x2x8xf32> -> vector<2x16x8xf32>
    %36 = vector.extract_strided_slice %35 {offsets = [0, 0, 4], sizes = [2, 16, 4], strides = [1, 1, 1]} : vector<2x16x8xf32> to vector<2x16x4xf32>
    %37 = vector.extract_strided_slice %35 {offsets = [0, 0, 0], sizes = [2, 16, 4], strides = [1, 1, 1]} : vector<2x16x8xf32> to vector<2x16x4xf32>
    %38 = tpu.concatenate %36, %37 in 2 : vector<2x16x4xf32>, vector<2x16x4xf32> -> vector<2x16x8xf32>
    %39 = vector.shape_cast %20 : vector<16x8xf32> to vector<1x16x8xf32>
    %40 = vector.broadcast %39 : vector<1x16x8xf32> to vector<2x16x8xf32>
    %41 = arith.mulf %35, %40 : vector<2x16x8xf32>
    %42 = vector.shape_cast %21 : vector<16x8xf32> to vector<1x16x8xf32>
    %43 = vector.broadcast %42 : vector<1x16x8xf32> to vector<2x16x8xf32>
    %44 = arith.mulf %38, %43 : vector<2x16x8xf32>
    %45 = arith.addf %41, %44 : vector<2x16x8xf32>
    %46 = vector.shape_cast %19 : vector<16x16xf32> to vector<16x2x8xf32>
    %47 = tpu.transpose %46, [1, 0, 2] : vector<16x2x8xf32> -> vector<2x16x8xf32>
    %48 = vector.shape_cast %33 : vector<4x16x8xf32> to vector<2x32x8xf32>
    %49 = arith.truncf %48 : vector<2x32x8xf32> to vector<2x32x8xbf16>
    %50 = arith.truncf %45 : vector<2x16x8xf32> to vector<2x16x8xbf16>
    "tpu.trace_start"() <{level = 10 : i32, message = "bqd,bkd->bqk"}> : () -> ()
    %cst_12 = arith.constant dense<0.000000e+00> : vector<2x32x16xf32>
    %51 = tpu.matmul %49, %50, %cst_12 {dimension_numbers = #tpu.dot_dimension_numbers<[2], [2], [1], [1], [0, 0, 0, 1, 1, 1], [0], [0]>} : vector<2x32x8xbf16>, vector<2x16x8xbf16>, vector<2x32x16xf32> -> vector<2x32x16xf32>
    "tpu.trace_stop"() : () -> ()
    %c0_13 = arith.constant 0 : index
    %c0_14 = arith.constant 0 : index
    %52 = vector.load %arg9[%c0_13, %c0_14] : memref<32x16xf32, #tpu.memory_space<vmem>>, vector<32x16xf32>
    %53 = vector.shape_cast %52 : vector<32x16xf32> to vector<1x32x16xf32>
    %54 = vector.broadcast %53 : vector<1x32x16xf32> to vector<2x32x16xf32>
    %55 = arith.addf %51, %54 : vector<2x32x16xf32>
    %cst_15 = arith.constant dense<0xFF800000> : vector<2x32xf32>
    %56 = vector.multi_reduction <maximumf>, %55, %cst_15 [2] : vector<2x32x16xf32> to vector<2x32xf32>
    %57 = vector.shape_cast %56 : vector<2x32xf32> to vector<2x32x1xf32>
    %58 = vector.broadcast %57 : vector<2x32x1xf32> to vector<2x32x16xf32>
    %59 = arith.subf %55, %58 : vector<2x32x16xf32>
    %60 = math.exp %59 : vector<2x32x16xf32>
    %cst_16 = arith.constant dense<0.000000e+00> : vector<2x32xf32>
    %61 = vector.multi_reduction <add>, %60, %cst_16 [2] : vector<2x32x16xf32> to vector<2x32xf32>
    %62 = vector.shape_cast %61 : vector<2x32xf32> to vector<2x32x1xf32>
    %63 = tpu.reciprocal %62 {approx = true} : vector<2x32x1xf32> -> vector<2x32x1xf32>
    %64 = vector.broadcast %63 : vector<2x32x1xf32> to vector<2x32x16xf32>
    %65 = arith.mulf %60, %64 : vector<2x32x16xf32>
    %66 = arith.truncf %65 : vector<2x32x16xf32> to vector<2x32x16xbf16>
    %67 = arith.truncf %47 : vector<2x16x8xf32> to vector<2x16x8xbf16>
    "tpu.trace_start"() <{level = 10 : i32, message = "bqk,bkd->bqd"}> : () -> ()
    %cst_17 = arith.constant dense<0.000000e+00> : vector<2x32x8xf32>
    %68 = tpu.matmul %66, %67, %cst_17 {dimension_numbers = #tpu.dot_dimension_numbers<[2], [1], [1], [2], [0, 0, 0, 1, 1, 2], [0], [0]>} : vector<2x32x16xbf16>, vector<2x16x8xbf16>, vector<2x32x8xf32> -> vector<2x32x8xf32>
    "tpu.trace_stop"() : () -> ()
    %69 = vector.shape_cast %68 : vector<2x32x8xf32> to vector<4x16x8xf32>
    %70 = tpu.transpose %69, [1, 0, 2] : vector<4x16x8xf32> -> vector<16x4x8xf32>
    %71 = vector.shape_cast %70 : vector<16x4x8xf32> to vector<16x32xf32>
    %72 = arith.truncf %71 : vector<16x32xf32> to vector<16x32xbf16>
    %c0_18 = arith.constant 0 : index
    %c0_19 = arith.constant 0 : index
    %73 = vector.load %arg2[%c0_18, %c0_19] : memref<32x32xbf16, #tpu.memory_space<vmem>>, vector<32x32xbf16>
    %cst_20 = arith.constant dense<0.000000e+00> : vector<16x32xf32>
    %74 = tpu.matmul %72, %73, %cst_20 {dimension_numbers = #tpu.dot_dimension_numbers<[1], [0], [0], [1], [0, 0, 1, 1], [], []>} : vector<16x32xbf16>, vector<32x32xbf16>, vector<16x32xf32> -> vector<16x32xf32>
    %75 = arith.addf %0, %74 : vector<16x32xf32>
    %c0_21 = arith.constant 0 : index
    %c0_22 = arith.constant 0 : index
    %76 = vector.load %arg6[%c0_21, %c0_22] : memref<1x32xf32, #tpu.memory_space<vmem>>, vector<1x32xf32>
    %77 = arith.mulf %75, %75 : vector<16x32xf32>
    %cst_23 = arith.constant dense<0.000000e+00> : vector<16xf32>
    %78 = vector.multi_reduction <add>, %77, %cst_23 [1] : vector<16x32xf32> to vector<16xf32>
    %79 = vector.shape_cast %78 : vector<16xf32> to vector<16x1xf32>
    %cst_24 = arith.constant 3.200000e+01 : f32
    %80 = vector.broadcast %cst_24 : f32 to vector<16x1xf32>
    %81 = arith.divf %79, %80 : vector<16x1xf32>
    %cst_25 = arith.constant 9.99999997E-7 : f32
    %82 = vector.broadcast %cst_25 : f32 to vector<16x1xf32>
    %83 = arith.addf %81, %82 : vector<16x1xf32>
    %84 = math.rsqrt %83 : vector<16x1xf32>
    %85 = vector.broadcast %84 : vector<16x1xf32> to vector<16x32xf32>
    %86 = arith.mulf %75, %85 : vector<16x32xf32>
    %87 = vector.broadcast %76 : vector<1x32xf32> to vector<16x32xf32>
    %88 = arith.mulf %86, %87 : vector<16x32xf32>
    %89 = arith.truncf %88 : vector<16x32xf32> to vector<16x32xbf16>
    %c0_26 = arith.constant 0 : index
    %c0_27 = arith.constant 0 : index
    %90 = vector.load %arg3[%c0_26, %c0_27] : memref<32x128xbf16, #tpu.memory_space<vmem>>, vector<32x128xbf16>
    %cst_28 = arith.constant dense<0.000000e+00> : vector<16x128xf32>
    %91 = tpu.matmul %89, %90, %cst_28 {dimension_numbers = #tpu.dot_dimension_numbers<[1], [0], [0], [1], [0, 0, 1, 1], [], []>} : vector<16x32xbf16>, vector<32x128xbf16>, vector<16x128xf32> -> vector<16x128xf32>
    %92 = vector.extract_strided_slice %91 {offsets = [0, 0], sizes = [16, 64], strides = [1, 1]} : vector<16x128xf32> to vector<16x64xf32>
    %93 = vector.extract_strided_slice %91 {offsets = [0, 64], sizes = [16, 64], strides = [1, 1]} : vector<16x128xf32> to vector<16x64xf32>
    %94 = arith.negf %92 : vector<16x64xf32>
    %95 = math.exp %94 : vector<16x64xf32>
    %cst_29 = arith.constant 1.000000e+00 : f32
    %96 = vector.broadcast %cst_29 : f32 to vector<16x64xf32>
    %97 = arith.addf %96, %95 : vector<16x64xf32>
    %98 = arith.divf %96, %97 : vector<16x64xf32>
    %99 = arith.mulf %92, %98 : vector<16x64xf32>
    %100 = arith.mulf %93, %99 : vector<16x64xf32>
    %101 = arith.truncf %100 : vector<16x64xf32> to vector<16x64xbf16>
    %c0_30 = arith.constant 0 : index
    %c0_31 = arith.constant 0 : index
    %102 = vector.load %arg4[%c0_30, %c0_31] : memref<64x32xbf16, #tpu.memory_space<vmem>>, vector<64x32xbf16>
    %cst_32 = arith.constant dense<0.000000e+00> : vector<16x32xf32>
    %103 = tpu.matmul %101, %102, %cst_32 {dimension_numbers = #tpu.dot_dimension_numbers<[1], [0], [0], [1], [0, 0, 1, 1], [], []>} : vector<16x64xbf16>, vector<64x32xbf16>, vector<16x32xf32> -> vector<16x32xf32>
    %104 = arith.addf %75, %103 : vector<16x32xf32>
    %c0_33 = arith.constant 0 : index
    %c0_34 = arith.constant 0 : index
    %105 = vector.load %arg10[%c0_33, %c0_34] : memref<16x32xf32, #tpu.memory_space<vmem>>, vector<16x32xf32>
    tpu.vector_store %arg10[%c0_33, %c0_34], %104 {strides = array<i32>} : memref<16x32xf32, #tpu.memory_space<vmem>>, vector<16x32xf32>,
    return
  }
}

</mosaic_0001>

<llo_original>
// kernel: phi3_decoder_layer.1
$region0: #{phi3_decoder_layer.1}
  #allocation0 [shape = 'u32[]', space=smem, size = 0x4, offset = 0x4, fixed_abs, tag = 'smem constant byte address 0x4 - core index']
  #allocation1 [shape = 'u32[144,128]{1,0:T(1,128)}', space=vmem, size = 0x12000, scoped, tag = 'internal scratch']
  %s0 = inlined_call_operand.vmem [shape: f32[16,32], index: 0, kind: input, shape index: {}]
  %s1 = inlined_call_operand.vmem [shape: bf16[32,64], index: 1, kind: input, shape index: {}]
  %s2 = inlined_call_operand.vmem [shape: bf16[32,32], index: 2, kind: input, shape index: {}]
  %s3 = inlined_call_operand.vmem [shape: bf16[32,128], index: 3, kind: input, shape index: {}]
  %s4 = inlined_call_operand.vmem [shape: bf16[64,32], index: 4, kind: input, shape index: {}]
  %s5 = inlined_call_operand.vmem [shape: f32[1,32], index: 5, kind: input, shape index: {}]
  %s6 = inlined_call_operand.vmem [shape: f32[1,32], index: 6, kind: input, shape index: {}]
  %s7 = inlined_call_operand.vmem [shape: f32[16,8], index: 7, kind: input, shape index: {}]
  %s8 = inlined_call_operand.vmem [shape: f32[16,8], index: 8, kind: input, shape index: {}]
  %s9 = inlined_call_operand.vmem [shape: f32[32,16], index: 9, kind: input, shape index: {}]
  %s10 = inlined_call_operand.hbm [shape: f32[16,32], index: 10, kind: output, shape index: {}]
  %s11 = sld [smem:[#allocation0]]
  $region50: #{phi3_decoder_layer.1} parent=0
    _
  %s13 = ssub.s32 1, %s11
  %s14 = scalar_select 0, %s13, %s11
  $region1: #{phi3_decoder_layer.1} parent=0
    #allocation2 [shape = 'u8[8192]{0}', space=vmem, size = 0x2000, scoped, tag = 'output window, operand 0, single buffered']
    #allocation3 [shape = 's32[1]{0}', space=sflag, size = 0x4, scoped, tag = 'scoped memory for phi3_decoder_layer.1']
    %15 = vsyncpa [#allocation3], 0
    // Predicated region
    $region2: #{phi3_decoder_layer.1} parent=1 // pred_check
      _
    $region3: #{phi3_decoder_layer.1} parent=1 // pred_check_branch
      %17 = sbr.rel (0) target = $region5
    $region4: #{phi3_decoder_layer.1} parent=1 // pred_region
      _
    $region5: #{phi3_decoder_layer.1} parent=1 // pred_fallthru
      _
    // Predicated region
    $region6: #{phi3_decoder_layer.1} parent=1 // pred_check
      _
    $region7: #{phi3_decoder_layer.1} parent=1 // pred_check_branch
      %19 = sbr.rel (0) target = $region9
    $region8: #{phi3_decoder_layer.1} parent=1 // pred_region
      _
    $region9: #{phi3_decoder_layer.1} parent=1 // pred_fallthru
      _
    // Predicated region
    $region10: #{phi3_decoder_layer.1} parent=1 // pred_check
      _
    $region11: #{phi3_decoder_layer.1} parent=1 // pred_check_branch
      %21 = sbr.rel (0) target = $region13
    $region12: #{phi3_decoder_layer.1} parent=1 // pred_region
      _
    $region13: #{phi3_decoder_layer.1} parent=1 // pred_fallthru
      _
    // Predicated region
    $region14: #{phi3_decoder_layer.1} parent=1 // pred_check
      _
    $region15: #{phi3_decoder_layer.1} parent=1 // pred_check_branch
      %23 = sbr.rel (0) target = $region17
    $region16: #{phi3_decoder_layer.1} parent=1 // pred_region
      _
    $region17: #{phi3_decoder_layer.1} parent=1 // pred_fallthru
      _
    // Predicated region
    $region18: #{phi3_decoder_layer.1} parent=1 // pred_check
      _
    $region19: #{phi3_decoder_layer.1} parent=1 // pred_check_branch
      %25 = sbr.rel (0) target = $region21
    $region20: #{phi3_decoder_layer.1} parent=1 // pred_region
      _
    $region21: #{phi3_decoder_layer.1} parent=1 // pred_fallthru
      _
    // Predicated region
    $region22: #{phi3_decoder_layer.1} parent=1 // pred_check
      _
    $region23: #{phi3_decoder_layer.1} parent=1 // pred_check_branch
      %27 = sbr.rel (0) target = $region25
    $region24: #{phi3_decoder_layer.1} parent=1 // pred_region
      _
    $region25: #{phi3_decoder_layer.1} parent=1 // pred_fallthru
      _
    // Predicated region
    $region26: #{phi3_decoder_layer.1} parent=1 // pred_check
      _
    $region27: #{phi3_decoder_layer.1} parent=1 // pred_check_branch
      %29 = sbr.rel (0) target = $region29
    $region28: #{phi3_decoder_layer.1} parent=1 // pred_region
      _
    $region29: #{phi3_decoder_layer.1} parent=1 // pred_fallthru
      _
    // Predicated region
    $region30: #{phi3_decoder_layer.1} parent=1 // pred_check
      _
    $region31: #{phi3_decoder_layer.1} parent=1 // pred_check_branch
      %31 = sbr.rel (0) target = $region33
    $region32: #{phi3_decoder_layer.1} parent=1 // pred_region
      _
    $region33: #{phi3_decoder_layer.1} parent=1 // pred_fallthru
      _
    // Predicated region
    $region34: #{phi3_decoder_layer.1} parent=1 // pred_check
      _
    $region35: #{phi3_decoder_layer.1} parent=1 // pred_check_branch
      %33 = sbr.rel (0) target = $region37
    $region36: #{phi3_decoder_layer.1} parent=1 // pred_region
      _
    $region37: #{phi3_decoder_layer.1} parent=1 // pred_fallthru
      _
    // Predicated region
    $region38: #{phi3_decoder_layer.1} parent=1 // pred_check
      _
    $region39: #{phi3_decoder_layer.1} parent=1 // pred_check_branch
      %35 = sbr.rel (0) target = $region41
    $region40: #{phi3_decoder_layer.1} parent=1 // pred_region
      _
    $region41: #{phi3_decoder_layer.1} parent=1 // pred_fallthru
      _
    %v37 = vld [vmem:[%s0] sm:$0xff]
    %v38 = vld [vmem:[%s0 + $0x8] sm:$0xff]
    %v39 = vld [vmem:[%s5] sm:$0x1]
    %v40 = vmul.f32 %v37, %v37
    %v41 = vmul.f32 %v38, %v38
    %vm42 = vcmask 261120
    %v43 = vsel %vm42, %v40, 0.0
    %44 = vadd.xlane.f32.xlu0 %v43
    %v45 = vpop.xlane.xlu0 %44
    %v46 = vsel %vm42, %v41, 0.0
    %47 = vadd.xlane.f32.xlu0 %v46
    %v48 = vpop.xlane.xlu0 %47
    %v49 = vrcp.pop 32.0
    %v50 = vmul.f32 %v45, %v49
    %v51 = vmul.f32 %v48, %v49
    %v52 = vadd.f32 %v50, 1e-06
    %v53 = vadd.f32 %v51, 1e-06
    %v54 = vrsqrt.pop %v52
    %v55 = vrsqrt.pop %v53
    %v56 = vmul.f32 %v37, %v54
    %v57 = vmul.f32 %v38, %v55
    %v59 = vlaneseq
    %v60 = vshrl.u32 %v59, 7
    %v61 = vsub.s32 0, %v60
    %v62 = vrot.slane %v39, %v61
    %v64 = vmul.f32 %v56, %v62
    %v65 = vmul.f32 %v57, %v62
    %v66 = vpack.c.bf16 %v65, %v64
    %v67 = vld [vmem:[%s1] sm:$0xf]
    %v68 = vld [vmem:[%s1 + $0x4] sm:$0xf]
    %v69 = vld [vmem:[%s1 + $0x8] sm:$0xf]
    %v70 = vld [vmem:[%s1 + $0xc] sm:$0xf]
    %v75 = vunpack.c.l.b16 %v67
    %v76 = vunpack.c.l.b16 %v68
    %v77 = vunpack.c.l.b16 %v69
    %v78 = vunpack.c.l.b16 %v70
    %v79 = vpack.c.b16 %v76, %v75
    %v80 = vpack.c.b16 %v78, %v77
    %v84 = vsel %vm42, %v66, 0
    %86 = vmatprep.subr.bf16.mxu0 0
    %87 = vmatpush1.bf16.msra.mxu0 %v79
    %88 = vmatprep.subr.bf16.mxu0 0
    %89 = vmatpush1.bf16.msra.mxu0 %v80
    %90 = vmatprep.subr.bf16.mxu0 0
    %91 = vmatpush1.bf16.msra.mxu0 0
    %92 = vmatprep.subr.bf16.mxu0 0
    %93 = vmatpush1.bf16.msra.mxu0 0
    %94 = vmatprep.subr.bf16.mxu0 0
    %95 = vmatpush1.bf16.msra.mxu0 0
    %96 = vmatprep.subr.bf16.mxu0 0
    %97 = vmatpush1.bf16.msra.mxu0 0
    %98 = vmatprep.subr.bf16.mxu0 0
    %99 = vmatpush1.bf16.msra.mxu0 0
    %100 = vmatprep.subr.bf16.mxu0 0
    %101 = vmatpush1.bf16.msra.mxu0 0
    %102 = vmatprep.subr.bf16.mxu0 0
    %103 = vmatpush1.bf16.msra.mxu0 0
    %104 = vmatprep.subr.bf16.mxu0 0
    %105 = vmatpush1.bf16.msra.mxu0 0
    %106 = vmatprep.subr.bf16.mxu0 0
    %107 = vmatpush1.bf16.msra.mxu0 0
    %108 = vmatprep.subr.bf16.mxu0 0
    %109 = vmatpush1.bf16.msra.mxu0 0
    %110 = vmatprep.subr.bf16.mxu0 0
    %111 = vmatpush1.bf16.msra.mxu0 0
    %112 = vmatprep.subr.bf16.mxu0 0
    %113 = vmatpush1.bf16.msra.mxu0 0
    %114 = vmatprep.subr.bf16.mxu0 0
    %115 = vmatpush1.bf16.msra.mxu0 0
    %116 = vmatprep.subr.bf16.mxu0 0
    %117 = vmatpush1.bf16.msra.mxu0 0
    %118 = vmatprep.mubr.bf16.mxu0 0
    %119 = vmatmul.mubr.bf16.gmra.mrb[0].mxu0 %v84
    %v120 = vpop.f32.mrb[0].mxu0
    %v121 = vadd.f32 0.0, %v120
    %v122 = vpop.f32.mrb[0].mxu0
    %v123 = vpop.f32.mrb[0].mxu0
    %v124 = vadd.f32 0.0, %v123
    %v125 = vpop.f32.mrb[0].mxu0
    %126 = vdwg.mxu0
    %v127 = vld [vmem:[%s7] sm:$0xff]
    %v128 = vld [vmem:[%s7 + $0x8] sm:$0xff]
    %v129 = vld [vmem:[%s8] sm:$0xff]
    %v130 = vld [vmem:[%s8 + $0x8] sm:$0xff]
    %133 = vrot.lane.b32.xlu0 %v121, 120
    %v134 = vpop.permute.xlu0 %133
    %135 = vrot.lane.b32.xlu0 %v124, 120
    %v136 = vpop.permute.xlu0 %135
    %139 = vrot.lane.b32.xlu0 %v121, 112
    %v140 = vpop.permute.xlu0 %139
    %141 = vrot.lane.b32.xlu0 %v124, 112
    %v142 = vpop.permute.xlu0 %141
    %145 = vrot.lane.b32.xlu0 %v121, 104
    %v146 = vpop.permute.xlu0 %145
    %147 = vrot.lane.b32.xlu0 %v124, 104
    %v148 = vpop.permute.xlu0 %147
    %v151 = vcombine.low %v121, %v140
    %v152 = vcombine.high %v121, %v140
    %v154 = vunpack.c.l.s4 1983009808
    %v155 = vunpack.c.0.s8 %v154
    %v156 = vlaneseq
    %v157 = vshrl.u32 %v156, 7
    %v158 = vsub.s32 %v155, %v157
    %v159 = vrot.slane %v151, %v158
    %v161 = vunpack.c.l.s4 1983009808
    %v162 = vunpack.c.0.s8 %v161
    %v163 = vlaneseq
    %v164 = vshrl.u32 %v163, 7
    %v165 = vsub.s32 %v162, %v164
    %v166 = vrot.slane %v152, %v165
    %v167 = vcombine.low %v134, %v146
    %v168 = vcombine.high %v134, %v146
    %v170 = vunpack.c.l.s4 1983009808
    %v171 = vunpack.c.0.s8 %v170
    %v172 = vlaneseq
    %v173 = vshrl.u32 %v172, 7
    %v174 = vsub.s32 %v171, %v173
    %v175 = vrot.slane %v167, %v174
    %v177 = vunpack.c.l.s4 1983009808
    %v178 = vunpack.c.0.s8 %v177
    %v179 = vlaneseq
    %v180 = vshrl.u32 %v179, 7
    %v181 = vsub.s32 %v178, %v180
    %v182 = vrot.slane %v168, %v181
    %v183 = vcombine.low %v159, %v175
    %v184 = vcombine.high %v159, %v175
    %v186 = vunpack.c.l.s4 1934713408
    %v187 = vunpack.c.0.s8 %v186
    %v188 = vlaneseq
    %v189 = vshrl.u32 %v188, 7
    %v190 = vsub.s32 %v187, %v189
    %v191 = vrot.slane %v183, %v190
    %v193 = vunpack.c.l.s4 1934713408
    %v194 = vunpack.c.0.s8 %v193
    %v195 = vlaneseq
    %v196 = vshrl.u32 %v195, 7
    %v197 = vsub.s32 %v194, %v196
    %v198 = vrot.slane %v184, %v197
    %v199 = vcombine.low %v166, %v182
    %v200 = vcombine.high %v166, %v182
    %v202 = vunpack.c.l.s4 1934713408
    %v203 = vunpack.c.0.s8 %v202
    %v204 = vlaneseq
    %v205 = vshrl.u32 %v204, 7
    %v206 = vsub.s32 %v203, %v205
    %v207 = vrot.slane %v199, %v206
    %v209 = vunpack.c.l.s4 1934713408
    %v210 = vunpack.c.0.s8 %v209
    %v211 = vlaneseq
    %v212 = vshrl.u32 %v211, 7
    %v213 = vsub.s32 %v210, %v212
    %v214 = vrot.slane %v200, %v213
    %v215 = vcombine.high %v191, 0.0
    %v216 = vcombine.high %v198, 0.0
    %v217 = vcombine.high %v207, 0.0
    %v218 = vcombine.high %v214, 0.0
    %v219 = vcombine.low %v124, %v142
    %v220 = vcombine.high %v124, %v142
    %v222 = vunpack.c.l.s4 1983009808
    %v223 = vunpack.c.0.s8 %v222
    %v224 = vlaneseq
    %v225 = vshrl.u32 %v224, 7
    %v226 = vsub.s32 %v223, %v225
    %v227 = vrot.slane %v219, %v226
    %v229 = vunpack.c.l.s4 1983009808
    %v230 = vunpack.c.0.s8 %v229
    %v231 = vlaneseq
    %v232 = vshrl.u32 %v231, 7
    %v233 = vsub.s32 %v230, %v232
    %v234 = vrot.slane %v220, %v233
    %v235 = vcombine.low %v136, %v148
    %v236 = vcombine.high %v136, %v148
    %v238 = vunpack.c.l.s4 1983009808
    %v239 = vunpack.c.0.s8 %v238
    %v240 = vlaneseq
    %v241 = vshrl.u32 %v240, 7
    %v242 = vsub.s32 %v239, %v241
    %v243 = vrot.slane %v235, %v242
    %v245 = vunpack.c.l.s4 1983009808
    %v246 = vunpack.c.0.s8 %v245
    %v247 = vlaneseq
    %v248 = vshrl.u32 %v247, 7
    %v249 = vsub.s32 %v246, %v248
    %v250 = vrot.slane %v236, %v249
    %v251 = vcombine.low %v227, %v243
    %v252 = vcombine.high %v227, %v243
    %v254 = vunpack.c.l.s4 1934713408
    %v255 = vunpack.c.0.s8 %v254
    %v256 = vlaneseq
    %v257 = vshrl.u32 %v256, 7
    %v258 = vsub.s32 %v255, %v257
    %v259 = vrot.slane %v251, %v258
    %v261 = vunpack.c.l.s4 1934713408
    %v262 = vunpack.c.0.s8 %v261
    %v263 = vlaneseq
    %v264 = vshrl.u32 %v263, 7
    %v265 = vsub.s32 %v262, %v264
    %v266 = vrot.slane %v252, %v265
    %v267 = vcombine.low %v234, %v250
    %v268 = vcombine.high %v234, %v250
    %v270 = vunpack.c.l.s4 1934713408
    %v271 = vunpack.c.0.s8 %v270
    %v272 = vlaneseq
    %v273 = vshrl.u32 %v272, 7
    %v274 = vsub.s32 %v271, %v273
    %v275 = vrot.slane %v267, %v274
    %v277 = vunpack.c.l.s4 1934713408
    %v278 = vunpack.c.0.s8 %v277
    %v279 = vlaneseq
    %v280 = vshrl.u32 %v279, 7
    %v281 = vsub.s32 %v278, %v280
    %v282 = vrot.slane %v268, %v281
    %v283 = vcombine.high %v259, 0.0
    %v284 = vcombine.high %v266, 0.0
    %v285 = vcombine.high %v275, 0.0
    %v286 = vcombine.high %v282, 0.0
    %v287 = vcombine.low %v191, %v198
    %v289 = vunpack.c.l.s4 1983009808
    %v290 = vunpack.c.0.s8 %v289
    %v291 = vlaneseq
    %v292 = vshrl.u32 %v291, 7
    %v293 = vsub.s32 %v290, %v292
    %v294 = vrot.slane %v287, %v293
    %v295 = vcombine.low %v215, %v216
    %v297 = vunpack.c.l.s4 1983009808
    %v298 = vunpack.c.0.s8 %v297
    %v299 = vlaneseq
    %v300 = vshrl.u32 %v299, 7
    %v301 = vsub.s32 %v298, %v300
    %v302 = vrot.slane %v295, %v301
    %v303 = vcombine.low %v207, %v214
    %v305 = vunpack.c.l.s4 1983009808
    %v306 = vunpack.c.0.s8 %v305
    %v307 = vlaneseq
    %v308 = vshrl.u32 %v307, 7
    %v309 = vsub.s32 %v306, %v308
    %v310 = vrot.slane %v303, %v309
    %v311 = vcombine.low %v217, %v218
    %v313 = vunpack.c.l.s4 1983009808
    %v314 = vunpack.c.0.s8 %v313
    %v315 = vlaneseq
    %v316 = vshrl.u32 %v315, 7
    %v317 = vsub.s32 %v314, %v316
    %v318 = vrot.slane %v311, %v317
    %v319 = vcombine.low %v294, %v302
    %v320 = vcombine.high %v294, %v302
    %v322 = vunpack.c.l.s4 1934713408
    %v323 = vunpack.c.0.s8 %v322
    %v324 = vlaneseq
    %v325 = vshrl.u32 %v324, 7
    %v326 = vsub.s32 %v323, %v325
    %v327 = vrot.slane %v319, %v326
    %v329 = vunpack.c.l.s4 1934713408
    %v330 = vunpack.c.0.s8 %v329
    %v331 = vlaneseq
    %v332 = vshrl.u32 %v331, 7
    %v333 = vsub.s32 %v330, %v332
    %v334 = vrot.slane %v320, %v333
    %v335 = vcombine.low %v310, %v318
    %v336 = vcombine.high %v310, %v318
    %v338 = vunpack.c.l.s4 1934713408
    %v339 = vunpack.c.0.s8 %v338
    %v340 = vlaneseq
    %v341 = vshrl.u32 %v340, 7
    %v342 = vsub.s32 %v339, %v341
    %v343 = vrot.slane %v335, %v342
    %v345 = vunpack.c.l.s4 1934713408
    %v346 = vunpack.c.0.s8 %v345
    %v347 = vlaneseq
    %v348 = vshrl.u32 %v347, 7
    %v349 = vsub.s32 %v346, %v348
    %v350 = vrot.slane %v336, %v349
    %v351 = vcombine.low %v327, %v343
    %v352 = vcombine.high %v327, %v343
    %v353 = vcombine.low %v334, %v350
    %v354 = vcombine.high %v334, %v350
    %v355 = vcombine.low %v259, %v266
    %v357 = vunpack.c.l.s4 1983009808
    %v358 = vunpack.c.0.s8 %v357
    %v359 = vlaneseq
    %v360 = vshrl.u32 %v359, 7
    %v361 = vsub.s32 %v358, %v360
    %v362 = vrot.slane %v355, %v361
    %v363 = vcombine.low %v283, %v284
    %v365 = vunpack.c.l.s4 1983009808
    %v366 = vunpack.c.0.s8 %v365
    %v367 = vlaneseq
    %v368 = vshrl.u32 %v367, 7
    %v369 = vsub.s32 %v366, %v368
    %v370 = vrot.slane %v363, %v369
    %v371 = vcombine.low %v275, %v282
    %v373 = vunpack.c.l.s4 1983009808
    %v374 = vunpack.c.0.s8 %v373
    %v375 = vlaneseq
    %v376 = vshrl.u32 %v375, 7
    %v377 = vsub.s32 %v374, %v376
    %v378 = vrot.slane %v371, %v377
    %v379 = vcombine.low %v285, %v286
    %v381 = vunpack.c.l.s4 1983009808
    %v382 = vunpack.c.0.s8 %v381
    %v383 = vlaneseq
    %v384 = vshrl.u32 %v383, 7
    %v385 = vsub.s32 %v382, %v384
    %v386 = vrot.slane %v379, %v385
    %v387 = vcombine.low %v362, %v370
    %v388 = vcombine.high %v362, %v370
    %v390 = vunpack.c.l.s4 1934713408
    %v391 = vunpack.c.0.s8 %v390
    %v392 = vlaneseq
    %v393 = vshrl.u32 %v392, 7
    %v394 = vsub.s32 %v391, %v393
    %v395 = vrot.slane %v387, %v394
    %v397 = vunpack.c.l.s4 1934713408
    %v398 = vunpack.c.0.s8 %v397
    %v399 = vlaneseq
    %v400 = vshrl.u32 %v399, 7
    %v401 = vsub.s32 %v398, %v400
    %v402 = vrot.slane %v388, %v401
    %v403 = vcombine.low %v378, %v386
    %v404 = vcombine.high %v378, %v386
    %v406 = vunpack.c.l.s4 1934713408
    %v407 = vunpack.c.0.s8 %v406
    %v408 = vlaneseq
    %v409 = vshrl.u32 %v408, 7
    %v410 = vsub.s32 %v407, %v409
    %v411 = vrot.slane %v403, %v410
    %v413 = vunpack.c.l.s4 1934713408
    %v414 = vunpack.c.0.s8 %v413
    %v415 = vlaneseq
    %v416 = vshrl.u32 %v415, 7
    %v417 = vsub.s32 %v414, %v416
    %v418 = vrot.slane %v404, %v417
    %v419 = vcombine.low %v395, %v411
    %v420 = vcombine.high %v395, %v411
    %v421 = vcombine.low %v402, %v418
    %v422 = vcombine.high %v402, %v418
    %431 = vrot.lane.b32.xlu0 %v351, 124
    %v432 = vpop.permute.xlu0 %431
    %433 = vrot.lane.b32.xlu0 %v419, 124
    %v434 = vpop.permute.xlu0 %433
    %435 = vrot.lane.b32.xlu0 %v352, 124
    %v436 = vpop.permute.xlu0 %435
    %437 = vrot.lane.b32.xlu0 %v420, 124
    %v438 = vpop.permute.xlu0 %437
    %439 = vrot.lane.b32.xlu0 %v353, 124
    %v440 = vpop.permute.xlu0 %439
    %441 = vrot.lane.b32.xlu0 %v421, 124
    %v442 = vpop.permute.xlu0 %441
    %443 = vrot.lane.b32.xlu0 %v354, 124
    %v444 = vpop.permute.xlu0 %443
    %445 = vrot.lane.b32.xlu0 %v422, 124
    %v446 = vpop.permute.xlu0 %445
    %455 = vrot.lane.b32.xlu0 %v351, 4
    %v456 = vpop.permute.xlu0 %455
    %457 = vrot.lane.b32.xlu0 %v419, 4
    %v458 = vpop.permute.xlu0 %457
    %459 = vrot.lane.b32.xlu0 %v352, 4
    %v460 = vpop.permute.xlu0 %459
    %461 = vrot.lane.b32.xlu0 %v420, 4
    %v462 = vpop.permute.xlu0 %461
    %463 = vrot.lane.b32.xlu0 %v353, 4
    %v464 = vpop.permute.xlu0 %463
    %465 = vrot.lane.b32.xlu0 %v421, 4
    %v466 = vpop.permute.xlu0 %465
    %467 = vrot.lane.b32.xlu0 %v354, 4
    %v468 = vpop.permute.xlu0 %467
    %469 = vrot.lane.b32.xlu0 %v422, 4
    %v470 = vpop.permute.xlu0 %469
    %vm479 = vcmask 31744
    %v480 = vsel %vm479, %v432, %v456
    %v481 = vsel %vm479, %v434, %v458
    %v482 = vsel %vm479, %v436, %v460
    %v483 = vsel %vm479, %v438, %v462
    %v484 = vsel %vm479, %v440, %v464
    %v485 = vsel %vm479, %v442, %v466
    %v486 = vsel %vm479, %v444, %v468
    %v487 = vsel %vm479, %v446, %v470
    %v488 = vmul.f32 %v351, %v127
    %v489 = vmul.f32 %v419, %v128
    %v490 = vmul.f32 %v352, %v127
    %v491 = vmul.f32 %v420, %v128
    %v492 = vmul.f32 %v353, %v127
    %v493 = vmul.f32 %v421, %v128
    %v494 = vmul.f32 %v354, %v127
    %v495 = vmul.f32 %v422, %v128
    %v496 = vmul.f32 %v480, %v129
    %v497 = vmul.f32 %v481, %v130
    %v498 = vmul.f32 %v482, %v129
    %v499 = vmul.f32 %v483, %v130
    %v500 = vmul.f32 %v484, %v129
    %v501 = vmul.f32 %v485, %v130
    %v502 = vmul.f32 %v486, %v129
    %v503 = vmul.f32 %v487, %v130
    %v504 = vadd.f32 %v488, %v496
    %v505 = vadd.f32 %v489, %v497
    %v506 = vadd.f32 %v490, %v498
    %v507 = vadd.f32 %v491, %v499
    %v508 = vadd.f32 %v492, %v500
    %v509 = vadd.f32 %v493, %v501
    %v510 = vadd.f32 %v494, %v502
    %v511 = vadd.f32 %v495, %v503
    %512 = vrot.lane.b32.xlu0 %v121, 96
    %v513 = vpop.permute.xlu0 %512
    %514 = vrot.lane.b32.xlu0 %v124, 96
    %v515 = vpop.permute.xlu0 %514
    %516 = vrot.lane.b32.xlu0 %v134, 96
    %v517 = vpop.permute.xlu0 %516
    %518 = vrot.lane.b32.xlu0 %v136, 96
    %v519 = vpop.permute.xlu0 %518
    %v524 = vcombine.high %v513, 0.0
    %v526 = vunpack.c.l.s4 1983009808
    %v527 = vunpack.c.0.s8 %v526
    %v528 = vlaneseq
    %v529 = vshrl.u32 %v528, 7
    %v530 = vsub.s32 %v527, %v529
    %v531 = vrot.slane %v513, %v530
    %v533 = vunpack.c.l.s4 1983009808
    %v534 = vunpack.c.0.s8 %v533
    %v535 = vlaneseq
    %v536 = vshrl.u32 %v535, 7
    %v537 = vsub.s32 %v534, %v536
    %v538 = vrot.slane %v524, %v537
    %v539 = vcombine.high %v517, 0.0
    %v541 = vunpack.c.l.s4 1983009808
    %v542 = vunpack.c.0.s8 %v541
    %v543 = vlaneseq
    %v544 = vshrl.u32 %v543, 7
    %v545 = vsub.s32 %v542, %v544
    %v546 = vrot.slane %v517, %v545
    %v548 = vunpack.c.l.s4 1983009808
    %v549 = vunpack.c.0.s8 %v548
    %v550 = vlaneseq
    %v551 = vshrl.u32 %v550, 7
    %v552 = vsub.s32 %v549, %v551
    %v553 = vrot.slane %v539, %v552
    %v554 = vcombine.low %v531, %v546
    %v555 = vcombine.high %v531, %v546
    %v557 = vunpack.c.l.s4 1934713408
    %v558 = vunpack.c.0.s8 %v557
    %v559 = vlaneseq
    %v560 = vshrl.u32 %v559, 7
    %v561 = vsub.s32 %v558, %v560
    %v562 = vrot.slane %v554, %v561
    %v564 = vunpack.c.l.s4 1934713408
    %v565 = vunpack.c.0.s8 %v564
    %v566 = vlaneseq
    %v567 = vshrl.u32 %v566, 7
    %v568 = vsub.s32 %v565, %v567
    %v569 = vrot.slane %v555, %v568
    %v570 = vcombine.low %v538, %v553
    %v571 = vcombine.high %v538, %v553
    %v573 = vunpack.c.l.s4 1934713408
    %v574 = vunpack.c.0.s8 %v573
    %v575 = vlaneseq
    %v576 = vshrl.u32 %v575, 7
    %v577 = vsub.s32 %v574, %v576
    %v578 = vrot.slane %v570, %v577
    %v580 = vunpack.c.l.s4 1934713408
    %v581 = vunpack.c.0.s8 %v580
    %v582 = vlaneseq
    %v583 = vshrl.u32 %v582, 7
    %v584 = vsub.s32 %v581, %v583
    %v585 = vrot.slane %v571, %v584
    %v586 = vcombine.high %v562, 0.0
    %v587 = vcombine.high %v569, 0.0
    %v588 = vcombine.high %v578, 0.0
    %v589 = vcombine.high %v585, 0.0
    %v590 = vcombine.high %v515, 0.0
    %v592 = vunpack.c.l.s4 1983009808
    %v593 = vunpack.c.0.s8 %v592
    %v594 = vlaneseq
    %v595 = vshrl.u32 %v594, 7
    %v596 = vsub.s32 %v593, %v595
    %v597 = vrot.slane %v515, %v596
    %v599 = vunpack.c.l.s4 1983009808
    %v600 = vunpack.c.0.s8 %v599
    %v601 = vlaneseq
    %v602 = vshrl.u32 %v601, 7
    %v603 = vsub.s32 %v600, %v602
    %v604 = vrot.slane %v590, %v603
    %v605 = vcombine.high %v519, 0.0
    %v607 = vunpack.c.l.s4 1983009808
    %v608 = vunpack.c.0.s8 %v607
    %v609 = vlaneseq
    %v610 = vshrl.u32 %v609, 7
    %v611 = vsub.s32 %v608, %v610
    %v612 = vrot.slane %v519, %v611
    %v614 = vunpack.c.l.s4 1983009808
    %v615 = vunpack.c.0.s8 %v614
    %v616 = vlaneseq
    %v617 = vshrl.u32 %v616, 7
    %v618 = vsub.s32 %v615, %v617
    %v619 = vrot.slane %v605, %v618
    %v620 = vcombine.low %v597, %v612
    %v621 = vcombine.high %v597, %v612
    %v623 = vunpack.c.l.s4 1934713408
    %v624 = vunpack.c.0.s8 %v623
    %v625 = vlaneseq
    %v626 = vshrl.u32 %v625, 7
    %v627 = vsub.s32 %v624, %v626
    %v628 = vrot.slane %v620, %v627
    %v630 = vunpack.c.l.s4 1934713408
    %v631 = vunpack.c.0.s8 %v630
    %v632 = vlaneseq
    %v633 = vshrl.u32 %v632, 7
    %v634 = vsub.s32 %v631, %v633
    %v635 = vrot.slane %v621, %v634
    %v636 = vcombine.low %v604, %v619
    %v637 = vcombine.high %v604, %v619
    %v639 = vunpack.c.l.s4 1934713408
    %v640 = vunpack.c.0.s8 %v639
    %v641 = vlaneseq
    %v642 = vshrl.u32 %v641, 7
    %v643 = vsub.s32 %v640, %v642
    %v644 = vrot.slane %v636, %v643
    %v646 = vunpack.c.l.s4 1934713408
    %v647 = vunpack.c.0.s8 %v646
    %v648 = vlaneseq
    %v649 = vshrl.u32 %v648, 7
    %v650 = vsub.s32 %v647, %v649
    %v651 = vrot.slane %v637, %v650
    %v652 = vcombine.high %v628, 0.0
    %v653 = vcombine.high %v635, 0.0
    %v654 = vcombine.high %v644, 0.0
    %v655 = vcombine.high %v651, 0.0
    %v656 = vcombine.low %v562, %v569
    %v658 = vunpack.c.l.s4 1983009808
    %v659 = vunpack.c.0.s8 %v658
    %v660 = vlaneseq
    %v661 = vshrl.u32 %v660, 7
    %v662 = vsub.s32 %v659, %v661
    %v663 = vrot.slane %v656, %v662
    %v664 = vcombine.low %v586, %v587
    %v666 = vunpack.c.l.s4 1983009808
    %v667 = vunpack.c.0.s8 %v666
    %v668 = vlaneseq
    %v669 = vshrl.u32 %v668, 7
    %v670 = vsub.s32 %v667, %v669
    %v671 = vrot.slane %v664, %v670
    %v672 = vcombine.low %v578, %v585
    %v674 = vunpack.c.l.s4 1983009808
    %v675 = vunpack.c.0.s8 %v674
    %v676 = vlaneseq
    %v677 = vshrl.u32 %v676, 7
    %v678 = vsub.s32 %v675, %v677
    %v679 = vrot.slane %v672, %v678
    %v680 = vcombine.low %v588, %v589
    %v682 = vunpack.c.l.s4 1983009808
    %v683 = vunpack.c.0.s8 %v682
    %v684 = vlaneseq
    %v685 = vshrl.u32 %v684, 7
    %v686 = vsub.s32 %v683, %v685
    %v687 = vrot.slane %v680, %v686
    %v688 = vcombine.low %v663, %v671
    %v690 = vunpack.c.l.s4 1934713408
    %v691 = vunpack.c.0.s8 %v690
    %v692 = vlaneseq
    %v693 = vshrl.u32 %v692, 7
    %v694 = vsub.s32 %v691, %v693
    %v695 = vrot.slane %v688, %v694
    %v696 = vcombine.low %v679, %v687
    %v698 = vunpack.c.l.s4 1934713408
    %v699 = vunpack.c.0.s8 %v698
    %v700 = vlaneseq
    %v701 = vshrl.u32 %v700, 7
    %v702 = vsub.s32 %v699, %v701
    %v703 = vrot.slane %v696, %v702
    %v704 = vcombine.low %v695, %v703
    %v705 = vcombine.high %v695, %v703
    %v706 = vcombine.low %v628, %v635
    %v708 = vunpack.c.l.s4 1983009808
    %v709 = vunpack.c.0.s8 %v708
    %v710 = vlaneseq
    %v711 = vshrl.u32 %v710, 7
    %v712 = vsub.s32 %v709, %v711
    %v713 = vrot.slane %v706, %v712
    %v714 = vcombine.low %v652, %v653
    %v716 = vunpack.c.l.s4 1983009808
    %v717 = vunpack.c.0.s8 %v716
    %v718 = vlaneseq
    %v719 = vshrl.u32 %v718, 7
    %v720 = vsub.s32 %v717, %v719
    %v721 = vrot.slane %v714, %v720
    %v722 = vcombine.low %v644, %v651
    %v724 = vunpack.c.l.s4 1983009808
    %v725 = vunpack.c.0.s8 %v724
    %v726 = vlaneseq
    %v727 = vshrl.u32 %v726, 7
    %v728 = vsub.s32 %v725, %v727
    %v729 = vrot.slane %v722, %v728
    %v730 = vcombine.low %v654, %v655
    %v732 = vunpack.c.l.s4 1983009808
    %v733 = vunpack.c.0.s8 %v732
    %v734 = vlaneseq
    %v735 = vshrl.u32 %v734, 7
    %v736 = vsub.s32 %v733, %v735
    %v737 = vrot.slane %v730, %v736
    %v738 = vcombine.low %v713, %v721
    %v740 = vunpack.c.l.s4 1934713408
    %v741 = vunpack.c.0.s8 %v740
    %v742 = vlaneseq
    %v743 = vshrl.u32 %v742, 7
    %v744 = vsub.s32 %v741, %v743
    %v745 = vrot.slane %v738, %v744
    %v746 = vcombine.low %v729, %v737
    %v748 = vunpack.c.l.s4 1934713408
    %v749 = vunpack.c.0.s8 %v748
    %v750 = vlaneseq
    %v751 = vshrl.u32 %v750, 7
    %v752 = vsub.s32 %v749, %v751
    %v753 = vrot.slane %v746, %v752
    %v754 = vcombine.low %v745, %v753
    %v755 = vcombine.high %v745, %v753
    %760 = vrot.lane.b32.xlu0 %v704, 124
    %v761 = vpop.permute.xlu0 %760
    %762 = vrot.lane.b32.xlu0 %v754, 124
    %v763 = vpop.permute.xlu0 %762
    %764 = vrot.lane.b32.xlu0 %v705, 124
    %v765 = vpop.permute.xlu0 %764
    %766 = vrot.lane.b32.xlu0 %v755, 124
    %v767 = vpop.permute.xlu0 %766
    %772 = vrot.lane.b32.xlu0 %v704, 4
    %v773 = vpop.permute.xlu0 %772
    %774 = vrot.lane.b32.xlu0 %v754, 4
    %v775 = vpop.permute.xlu0 %774
    %776 = vrot.lane.b32.xlu0 %v705, 4
    %v777 = vpop.permute.xlu0 %776
    %778 = vrot.lane.b32.xlu0 %v755, 4
    %v779 = vpop.permute.xlu0 %778
    %v784 = vsel %vm479, %v761, %v773
    %v785 = vsel %vm479, %v763, %v775
    %v786 = vsel %vm479, %v765, %v777
    %v787 = vsel %vm479, %v767, %v779
    %v788 = vmul.f32 %v704, %v127
    %v789 = vmul.f32 %v754, %v128
    %v790 = vmul.f32 %v705, %v127
    %v791 = vmul.f32 %v755, %v128
    %v792 = vmul.f32 %v784, %v129
    %v793 = vmul.f32 %v785, %v130
    %v794 = vmul.f32 %v786, %v129
    %v795 = vmul.f32 %v787, %v130
    %v796 = vadd.f32 %v788, %v792
    %v797 = vadd.f32 %v789, %v793
    %v798 = vadd.f32 %v790, %v794
    %v799 = vadd.f32 %v791, %v795
    %800 = vrot.lane.b32.xlu0 %v121, 80
    %v801 = vpop.permute.xlu0 %800
    %802 = vrot.lane.b32.xlu0 %v124, 80
    %v803 = vpop.permute.xlu0 %802
    %804 = vrot.lane.b32.xlu0 %v134, 80
    %v805 = vpop.permute.xlu0 %804
    %806 = vrot.lane.b32.xlu0 %v136, 80
    %v807 = vpop.permute.xlu0 %806
    %v812 = vcombine.high %v801, 0.0
    %v814 = vunpack.c.l.s4 1983009808
    %v815 = vunpack.c.0.s8 %v814
    %v816 = vlaneseq
    %v817 = vshrl.u32 %v816, 7
    %v818 = vsub.s32 %v815, %v817
    %v819 = vrot.slane %v801, %v818
    %v821 = vunpack.c.l.s4 1983009808
    %v822 = vunpack.c.0.s8 %v821
    %v823 = vlaneseq
    %v824 = vshrl.u32 %v823, 7
    %v825 = vsub.s32 %v822, %v824
    %v826 = vrot.slane %v812, %v825
    %v827 = vcombine.high %v805, 0.0
    %v829 = vunpack.c.l.s4 1983009808
    %v830 = vunpack.c.0.s8 %v829
    %v831 = vlaneseq
    %v832 = vshrl.u32 %v831, 7
    %v833 = vsub.s32 %v830, %v832
    %v834 = vrot.slane %v805, %v833
    %v836 = vunpack.c.l.s4 1983009808
    %v837 = vunpack.c.0.s8 %v836
    %v838 = vlaneseq
    %v839 = vshrl.u32 %v838, 7
    %v840 = vsub.s32 %v837, %v839
    %v841 = vrot.slane %v827, %v840
    %v842 = vcombine.low %v819, %v834
    %v843 = vcombine.high %v819, %v834
    %v845 = vunpack.c.l.s4 1934713408
    %v846 = vunpack.c.0.s8 %v845
    %v847 = vlaneseq
    %v848 = vshrl.u32 %v847, 7
    %v849 = vsub.s32 %v846, %v848
    %v850 = vrot.slane %v842, %v849
    %v852 = vunpack.c.l.s4 1934713408
    %v853 = vunpack.c.0.s8 %v852
    %v854 = vlaneseq
    %v855 = vshrl.u32 %v854, 7
    %v856 = vsub.s32 %v853, %v855
    %v857 = vrot.slane %v843, %v856
    %v858 = vcombine.low %v826, %v841
    %v859 = vcombine.high %v826, %v841
    %v861 = vunpack.c.l.s4 1934713408
    %v862 = vunpack.c.0.s8 %v861
    %v863 = vlaneseq
    %v864 = vshrl.u32 %v863, 7
    %v865 = vsub.s32 %v862, %v864
    %v866 = vrot.slane %v858, %v865
    %v868 = vunpack.c.l.s4 1934713408
    %v869 = vunpack.c.0.s8 %v868
    %v870 = vlaneseq
    %v871 = vshrl.u32 %v870, 7
    %v872 = vsub.s32 %v869, %v871
    %v873 = vrot.slane %v859, %v872
    %v874 = vcombine.high %v850, 0.0
    %v875 = vcombine.high %v857, 0.0
    %v876 = vcombine.high %v866, 0.0
    %v877 = vcombine.high %v873, 0.0
    %v878 = vcombine.high %v803, 0.0
    %v880 = vunpack.c.l.s4 1983009808
    %v881 = vunpack.c.0.s8 %v880
    %v882 = vlaneseq
    %v883 = vshrl.u32 %v882, 7
    %v884 = vsub.s32 %v881, %v883
    %v885 = vrot.slane %v803, %v884
    %v887 = vunpack.c.l.s4 1983009808
    %v888 = vunpack.c.0.s8 %v887
    %v889 = vlaneseq
    %v890 = vshrl.u32 %v889, 7
    %v891 = vsub.s32 %v888, %v890
    %v892 = vrot.slane %v878, %v891
    %v893 = vcombine.high %v807, 0.0
    %v895 = vunpack.c.l.s4 1983009808
    %v896 = vunpack.c.0.s8 %v895
    %v897 = vlaneseq
    %v898 = vshrl.u32 %v897, 7
    %v899 = vsub.s32 %v896, %v898
    %v900 = vrot.slane %v807, %v899
    %v902 = vunpack.c.l.s4 1983009808
    %v903 = vunpack.c.0.s8 %v902
    %v904 = vlaneseq
    %v905 = vshrl.u32 %v904, 7
    %v906 = vsub.s32 %v903, %v905
    %v907 = vrot.slane %v893, %v906
    %v908 = vcombine.low %v885, %v900
    %v909 = vcombine.high %v885, %v900
    %v911 = vunpack.c.l.s4 1934713408
    %v912 = vunpack.c.0.s8 %v911
    %v913 = vlaneseq
    %v914 = vshrl.u32 %v913, 7
    %v915 = vsub.s32 %v912, %v914
    %v916 = vrot.slane %v908, %v915
    %v918 = vunpack.c.l.s4 1934713408
    %v919 = vunpack.c.0.s8 %v918
    %v920 = vlaneseq
    %v921 = vshrl.u32 %v920, 7
    %v922 = vsub.s32 %v919, %v921
    %v923 = vrot.slane %v909, %v922
    %v924 = vcombine.low %v892, %v907
    %v925 = vcombine.high %v892, %v907
    %v927 = vunpack.c.l.s4 1934713408
    %v928 = vunpack.c.0.s8 %v927
    %v929 = vlaneseq
    %v930 = vshrl.u32 %v929, 7
    %v931 = vsub.s32 %v928, %v930
    %v932 = vrot.slane %v924, %v931
    %v934 = vunpack.c.l.s4 1934713408
    %v935 = vunpack.c.0.s8 %v934
    %v936 = vlaneseq
    %v937 = vshrl.u32 %v936, 7
    %v938 = vsub.s32 %v935, %v937
    %v939 = vrot.slane %v925, %v938
    %v940 = vcombine.high %v916, 0.0
    %v941 = vcombine.high %v923, 0.0
    %v942 = vcombine.high %v932, 0.0
    %v943 = vcombine.high %v939, 0.0
    %v944 = vcombine.low %v850, %v857
    %v946 = vunpack.c.l.s4 1983009808
    %v947 = vunpack.c.0.s8 %v946
    %v948 = vlaneseq
    %v949 = vshrl.u32 %v948, 7
    %v950 = vsub.s32 %v947, %v949
    %v951 = vrot.slane %v944, %v950
    %v952 = vcombine.low %v874, %v875
    %v954 = vunpack.c.l.s4 1983009808
    %v955 = vunpack.c.0.s8 %v954
    %v956 = vlaneseq
    %v957 = vshrl.u32 %v956, 7
    %v958 = vsub.s32 %v955, %v957
    %v959 = vrot.slane %v952, %v958
    %v960 = vcombine.low %v866, %v873
    %v962 = vunpack.c.l.s4 1983009808
    %v963 = vunpack.c.0.s8 %v962
    %v964 = vlaneseq
    %v965 = vshrl.u32 %v964, 7
    %v966 = vsub.s32 %v963, %v965
    %v967 = vrot.slane %v960, %v966
    %v968 = vcombine.low %v876, %v877
    %v970 = vunpack.c.l.s4 1983009808
    %v971 = vunpack.c.0.s8 %v970
    %v972 = vlaneseq
    %v973 = vshrl.u32 %v972, 7
    %v974 = vsub.s32 %v971, %v973
    %v975 = vrot.slane %v968, %v974
    %v976 = vcombine.low %v951, %v959
    %v978 = vunpack.c.l.s4 1934713408
    %v979 = vunpack.c.0.s8 %v978
    %v980 = vlaneseq
    %v981 = vshrl.u32 %v980, 7
    %v982 = vsub.s32 %v979, %v981
    %v983 = vrot.slane %v976, %v982
    %v984 = vcombine.low %v967, %v975
    %v986 = vunpack.c.l.s4 1934713408
    %v987 = vunpack.c.0.s8 %v986
    %v988 = vlaneseq
    %v989 = vshrl.u32 %v988, 7
    %v990 = vsub.s32 %v987, %v989
    %v991 = vrot.slane %v984, %v990
    %v992 = vcombine.low %v983, %v991
    %v993 = vcombine.high %v983, %v991
    %v994 = vcombine.low %v916, %v923
    %v996 = vunpack.c.l.s4 1983009808
    %v997 = vunpack.c.0.s8 %v996
    %v998 = vlaneseq
    %v999 = vshrl.u32 %v998, 7
    %v1000 = vsub.s32 %v997, %v999
    %v1001 = vrot.slane %v994, %v1000
    %v1002 = vcombine.low %v940, %v941
    %v1004 = vunpack.c.l.s4 1983009808
    %v1005 = vunpack.c.0.s8 %v1004
    %v1006 = vlaneseq
    %v1007 = vshrl.u32 %v1006, 7
    %v1008 = vsub.s32 %v1005, %v1007
    %v1009 = vrot.slane %v1002, %v1008
    %v1010 = vcombine.low %v932, %v939
    %v1012 = vunpack.c.l.s4 1983009808
    %v1013 = vunpack.c.0.s8 %v1012
    %v1014 = vlaneseq
    %v1015 = vshrl.u32 %v1014, 7
    %v1016 = vsub.s32 %v1013, %v1015
    %v1017 = vrot.slane %v1010, %v1016
    %v1018 = vcombine.low %v942, %v943
    %v1020 = vunpack.c.l.s4 1983009808
    %v1021 = vunpack.c.0.s8 %v1020
    %v1022 = vlaneseq
    %v1023 = vshrl.u32 %v1022, 7
    %v1024 = vsub.s32 %v1021, %v1023
    %v1025 = vrot.slane %v1018, %v1024
    %v1026 = vcombine.low %v1001, %v1009
    %v1028 = vunpack.c.l.s4 1934713408
    %v1029 = vunpack.c.0.s8 %v1028
    %v1030 = vlaneseq
    %v1031 = vshrl.u32 %v1030, 7
    %v1032 = vsub.s32 %v1029, %v1031
    %v1033 = vrot.slane %v1026, %v1032
    %v1034 = vcombine.low %v1017, %v1025
    %v1036 = vunpack.c.l.s4 1934713408
    %v1037 = vunpack.c.0.s8 %v1036
    %v1038 = vlaneseq
    %v1039 = vshrl.u32 %v1038, 7
    %v1040 = vsub.s32 %v1037, %v1039
    %v1041 = vrot.slane %v1034, %v1040
    %v1042 = vcombine.low %v1033, %v1041
    %v1043 = vcombine.high %v1033, %v1041
    %v1044 = vpack.c.bf16 %v505, %v504
    %v1045 = vpack.c.bf16 %v507, %v506
    %v1046 = vpack.c.bf16 %v509, %v508
    %v1047 = vpack.c.bf16 %v511, %v510
    %v1048 = vpack.c.bf16 %v797, %v796
    %v1049 = vpack.c.bf16 %v799, %v798
    %v1050 = vld [vmem:[%s9] sm:$0xff]
    %v1051 = vld [vmem:[%s9 + $0x8] sm:$0xff]
    %v1052 = vld [vmem:[%s9 + $0x10] sm:$0xff]
    %v1053 = vld [vmem:[%s9 + $0x18] sm:$0xff]
    %vm1054 = vcmask 64512
    %v1056 = vsel %vm1054, %v1044, 0
    %v1059 = vsel %vm1054, %v1045, 0
    %v1062 = vsel %vm1054, %v1048, 0
    %1064 = vmatprep.subr.bf16.mxu0 0
    %1065 = vmatpush1.bf16.xpose.msra.mxu0 %v1062
    %1066 = vmatprep.subr.bf16.mxu0 0
    %1067 = vmatpush1.bf16.xpose.msra.mxu0 0
    %1068 = vmatprep.subr.bf16.mxu0 0
    %1069 = vmatpush1.bf16.xpose.msra.mxu0 0
    %1070 = vmatprep.subr.bf16.mxu0 0
    %1071 = vmatpush1.bf16.xpose.msra.mxu0 0
    %1072 = vmatprep.subr.bf16.mxu0 0
    %1073 = vmatpush1.bf16.xpose.msra.mxu0 0
    %1074 = vmatprep.subr.bf16.mxu0 0
    %1075 = vmatpush1.bf16.xpose.msra.mxu0 0
    %1076 = vmatprep.subr.bf16.mxu0 0
    %1077 = vmatpush1.bf16.xpose.msra.mxu0 0
    %1078 = vmatprep.subr.bf16.mxu0 0
    %1079 = vmatpush1.bf16.xpose.msra.mxu0 0
    %1080 = vmatprep.subr.bf16.mxu0 0
    %1081 = vmatpush1.bf16.xpose.msra.mxu0 0
    %1082 = vmatprep.subr.bf16.mxu0 0
    %1083 = vmatpush1.bf16.xpose.msra.mxu0 0
    %1084 = vmatprep.subr.bf16.mxu0 0
    %1085 = vmatpush1.bf16.xpose.msra.mxu0 0
    %1086 = vmatprep.subr.bf16.mxu0 0
    %1087 = vmatpush1.bf16.xpose.msra.mxu0 0
    %1088 = vmatprep.subr.bf16.mxu0 0
    %1089 = vmatpush1.bf16.xpose.msra.mxu0 0
    %1090 = vmatprep.subr.bf16.mxu0 0
    %1091 = vmatpush1.bf16.xpose.msra.mxu0 0
    %1092 = vmatprep.subr.bf16.mxu0 0
    %1093 = vmatpush1.bf16.xpose.msra.mxu0 0
    %1094 = vmatprep.subr.bf16.mxu0 0
    %1095 = vmatpush1.bf16.xpose.msra.mxu0 0
    %1096 = vmatprep.mubr.bf16.mxu0 0
    %1097 = vmatmul.mubr.bf16.gmra.mrb[0].mxu0 %v1056
    %v1098 = vpop.f32.mrb[0].mxu0
    %v1099 = vadd.f32 %v1050, %v1098
    %v1100 = vpop.f32.mrb[0].mxu0
    %v1101 = vpop.f32.mrb[0].mxu0
    %v1102 = vadd.f32 %v1051, %v1101
    %v1103 = vpop.f32.mrb[0].mxu0
    %1104 = vmatprep.mubr.bf16.mxu0 0
    %1105 = vmatmul.mubr.bf16.gmra.mrb[0].mxu0 %v1059
    %v1106 = vpop.f32.mrb[0].mxu0
    %v1107 = vadd.f32 %v1052, %v1106
    %v1108 = vpop.f32.mrb[0].mxu0
    %v1109 = vpop.f32.mrb[0].mxu0
    %v1110 = vadd.f32 %v1053, %v1109
    %v1111 = vpop.f32.mrb[0].mxu0
    %1112 = vdwg.mxu0
    %v1114 = vsel %vm1054, %v1046, 0
    %v1117 = vsel %vm1054, %v1047, 0
    %v1120 = vsel %vm1054, %v1049, 0
    %1122 = vmatprep.subr.bf16.mxu0 0
    %1123 = vmatpush1.bf16.xpose.msra.mxu0 %v1120
    %1124 = vmatprep.subr.bf16.mxu0 0
    %1125 = vmatpush1.bf16.xpose.msra.mxu0 0
    %1126 = vmatprep.subr.bf16.mxu0 0
    %1127 = vmatpush1.bf16.xpose.msra.mxu0 0
    %1128 = vmatprep.subr.bf16.mxu0 0
    %1129 = vmatpush1.bf16.xpose.msra.mxu0 0
    %1130 = vmatprep.subr.bf16.mxu0 0
    %1131 = vmatpush1.bf16.xpose.msra.mxu0 0
    %1132 = vmatprep.subr.bf16.mxu0 0
    %1133 = vmatpush1.bf16.xpose.msra.mxu0 0
    %1134 = vmatprep.subr.bf16.mxu0 0
    %1135 = vmatpush1.bf16.xpose.msra.mxu0 0
    %1136 = vmatprep.subr.bf16.mxu0 0
    %1137 = vmatpush1.bf16.xpose.msra.mxu0 0
    %1138 = vmatprep.subr.bf16.mxu0 0
    %1139 = vmatpush1.bf16.xpose.msra.mxu0 0
    %1140 = vmatprep.subr.bf16.mxu0 0
    %1141 = vmatpush1.bf16.xpose.msra.mxu0 0
    %1142 = vmatprep.subr.bf16.mxu0 0
    %1143 = vmatpush1.bf16.xpose.msra.mxu0 0
    %1144 = vmatprep.subr.bf16.mxu0 0
    %1145 = vmatpush1.bf16.xpose.msra.mxu0 0
    %1146 = vmatprep.subr.bf16.mxu0 0
    %1147 = vmatpush1.bf16.xpose.msra.mxu0 0
    %1148 = vmatprep.subr.bf16.mxu0 0
    %1149 = vmatpush1.bf16.xpose.msra.mxu0 0
    %1150 = vmatprep.subr.bf16.mxu0 0
    %1151 = vmatpush1.bf16.xpose.msra.mxu0 0
    %1152 = vmatprep.subr.bf16.mxu0 0
    %1153 = vmatpush1.bf16.xpose.msra.mxu0 0
    %1154 = vmatprep.mubr.bf16.mxu0 0
    %1155 = vmatmul.mubr.bf16.gmra.mrb[0].mxu0 %v1114
    %v1156 = vpop.f32.mrb[0].mxu0
    %v1157 = vadd.f32 %v1050, %v1156
    %v1158 = vpop.f32.mrb[0].mxu0
    %v1159 = vpop.f32.mrb[0].mxu0
    %v1160 = vadd.f32 %v1051, %v1159
    %v1161 = vpop.f32.mrb[0].mxu0
    %1162 = vmatprep.mubr.bf16.mxu0 0
    %1163 = vmatmul.mubr.bf16.gmra.mrb[0].mxu0 %v1117
    %v1164 = vpop.f32.mrb[0].mxu0
    %v1165 = vadd.f32 %v1052, %v1164
    %v1166 = vpop.f32.mrb[0].mxu0
    %v1167 = vpop.f32.mrb[0].mxu0
    %v1168 = vadd.f32 %v1053, %v1167
    %v1169 = vpop.f32.mrb[0].mxu0
    %1170 = vdwg.mxu0
    %vm1171 = vcmask 130048
    %v1172 = vsel %vm1171, %v1099, -inf
    %1173 = vmax.xlane.f32.xlu0 %v1172
    %v1174 = vpop.xlane.xlu0 %1173
    %v1175 = vsel %vm1171, %v1102, -inf
    %1176 = vmax.xlane.f32.xlu0 %v1175
    %v1177 = vpop.xlane.xlu0 %1176
    %v1178 = vsel %vm1171, %v1107, -inf
    %1179 = vmax.xlane.f32.xlu0 %v1178
    %v1180 = vpop.xlane.xlu0 %1179
    %v1181 = vsel %vm1171, %v1110, -inf
    %1182 = vmax.xlane.f32.xlu0 %v1181
    %v1183 = vpop.xlane.xlu0 %1182
    %v1184 = vsel %vm1171, %v1157, -inf
    %1185 = vmax.xlane.f32.xlu0 %v1184
    %v1186 = vpop.xlane.xlu0 %1185
    %v1187 = vsel %vm1171, %v1160, -inf
    %1188 = vmax.xlane.f32.xlu0 %v1187
    %v1189 = vpop.xlane.xlu0 %1188
    %v1190 = vsel %vm1171, %v1165, -inf
    %1191 = vmax.xlane.f32.xlu0 %v1190
    %v1192 = vpop.xlane.xlu0 %1191
    %v1193 = vsel %vm1171, %v1168, -inf
    %1194 = vmax.xlane.f32.xlu0 %v1193
    %v1195 = vpop.xlane.xlu0 %1194
    %v1196 = vsub.f32 %v1099, %v1174
    %v1197 = vsub.f32 %v1102, %v1177
    %v1198 = vsub.f32 %v1107, %v1180
    %v1199 = vsub.f32 %v1110, %v1183
    %v1200 = vsub.f32 %v1157, %v1186
    %v1201 = vsub.f32 %v1160, %v1189
    %v1202 = vsub.f32 %v1165, %v1192
    %v1203 = vsub.f32 %v1168, %v1195
    %v1204 = vmul.f32 %v1196, 1.442695
    %v1205 = vpow.pop %v1204
    %v1206 = vmul.f32 %v1197, 1.442695
    %v1207 = vpow.pop %v1206
    %v1208 = vmul.f32 %v1198, 1.442695
    %v1209 = vpow.pop %v1208
    %v1210 = vmul.f32 %v1199, 1.442695
    %v1211 = vpow.pop %v1210
    %v1212 = vmul.f32 %v1200, 1.442695
    %v1213 = vpow.pop %v1212
    %v1214 = vmul.f32 %v1201, 1.442695
    %v1215 = vpow.pop %v1214
    %v1216 = vmul.f32 %v1202, 1.442695
    %v1217 = vpow.pop %v1216
    %v1218 = vmul.f32 %v1203, 1.442695
    %v1219 = vpow.pop %v1218
    %v1220 = vsel %vm1171, %v1205, 0.0
    %1221 = vadd.xlane.f32.xlu0 %v1220
    %v1222 = vpop.xlane.xlu0 %1221
    %v1223 = vsel %vm1171, %v1207, 0.0
    %1224 = vadd.xlane.f32.xlu0 %v1223
    %v1225 = vpop.xlane.xlu0 %1224
    %v1226 = vsel %vm1171, %v1209, 0.0
    %1227 = vadd.xlane.f32.xlu0 %v1226
    %v1228 = vpop.xlane.xlu0 %1227
    %v1229 = vsel %vm1171, %v1211, 0.0
    %1230 = vadd.xlane.f32.xlu0 %v1229
    %v1231 = vpop.xlane.xlu0 %1230
    %v1232 = vsel %vm1171, %v1213, 0.0
    %1233 = vadd.xlane.f32.xlu0 %v1232
    %v1234 = vpop.xlane.xlu0 %1233
    %v1235 = vsel %vm1171, %v1215, 0.0
    %1236 = vadd.xlane.f32.xlu0 %v1235
    %v1237 = vpop.xlane.xlu0 %1236
    %v1238 = vsel %vm1171, %v1217, 0.0
    %1239 = vadd.xlane.f32.xlu0 %v1238
    %v1240 = vpop.xlane.xlu0 %1239
    %v1241 = vsel %vm1171, %v1219, 0.0
    %1242 = vadd.xlane.f32.xlu0 %v1241
    %v1243 = vpop.xlane.xlu0 %1242
    %v1244 = vrcp.pop %v1222
    %v1245 = vrcp.pop %v1225
    %v1246 = vrcp.pop %v1228
    %v1247 = vrcp.pop %v1231
    %v1248 = vrcp.pop %v1234
    %v1249 = vrcp.pop %v1237
    %v1250 = vrcp.pop %v1240
    %v1251 = vrcp.pop %v1243
    %v1252 = vmul.f32 %v1205, %v1244
    %v1253 = vmul.f32 %v1207, %v1245
    %v1254 = vmul.f32 %v1209, %v1246
    %v1255 = vmul.f32 %v1211, %v1247
    %v1256 = vmul.f32 %v1213, %v1248
    %v1257 = vmul.f32 %v1215, %v1249
    %v1258 = vmul.f32 %v1217, %v1250
    %v1259 = vmul.f32 %v1219, %v1251
    %v1260 = vpack.c.bf16 %v1253, %v1252
    %v1261 = vpack.c.bf16 %v1255, %v1254
    %v1262 = vpack.c.bf16 %v1257, %v1256
    %v1263 = vpack.c.bf16 %v1259, %v1258
    %v1264 = vpack.c.bf16 %v1042, %v992
    %v1265 = vpack.c.bf16 %v1043, %v993
    %v1267 = vsel %vm1171, %v1260, 0
    %v1270 = vsel %vm1171, %v1261, 0
    %1272 = vmatprep.subr.bf16.mxu0 0
    %1273 = vmatpush1.bf16.msra.mxu0 %v1264
    %1274 = vmatprep.subr.bf16.mxu0 0
    %1275 = vmatpush1.bf16.msra.mxu0 0
    %1276 = vmatprep.subr.bf16.mxu0 0
    %1277 = vmatpush1.bf16.msra.mxu0 0
    %1278 = vmatprep.subr.bf16.mxu0 0
    %1279 = vmatpush1.bf16.msra.mxu0 0
    %1280 = vmatprep.subr.bf16.mxu0 0
    %1281 = vmatpush1.bf16.msra.mxu0 0
    %1282 = vmatprep.subr.bf16.mxu0 0
    %1283 = vmatpush1.bf16.msra.mxu0 0
    %1284 = vmatprep.subr.bf16.mxu0 0
    %1285 = vmatpush1.bf16.msra.mxu0 0
    %1286 = vmatprep.subr.bf16.mxu0 0
    %1287 = vmatpush1.bf16.msra.mxu0 0
    %1288 = vmatprep.subr.bf16.mxu0 0
    %1289 = vmatpush1.bf16.msra.mxu0 0
    %1290 = vmatprep.subr.bf16.mxu0 0
    %1291 = vmatpush1.bf16.msra.mxu0 0
    %1292 = vmatprep.subr.bf16.mxu0 0
    %1293 = vmatpush1.bf16.msra.mxu0 0
    %1294 = vmatprep.subr.bf16.mxu0 0
    %1295 = vmatpush1.bf16.msra.mxu0 0
    %1296 = vmatprep.subr.bf16.mxu0 0
    %1297 = vmatpush1.bf16.msra.mxu0 0
    %1298 = vmatprep.subr.bf16.mxu0 0
    %1299 = vmatpush1.bf16.msra.mxu0 0
    %1300 = vmatprep.subr.bf16.mxu0 0
    %1301 = vmatpush1.bf16.msra.mxu0 0
    %1302 = vmatprep.subr.bf16.mxu0 0
    %1303 = vmatpush1.bf16.msra.mxu0 0
    %1304 = vmatprep.mubr.bf16.mxu0 0
    %1305 = vmatmul.mubr.bf16.gmra.mrb[0].mxu0 %v1267
    %v1306 = vpop.f32.mrb[0].mxu0
    %v1307 = vadd.f32 0.0, %v1306
    %v1308 = vpop.f32.mrb[0].mxu0
    %v1309 = vpop.f32.mrb[0].mxu0
    %v1310 = vadd.f32 0.0, %v1309
    %v1311 = vpop.f32.mrb[0].mxu0
    %1312 = vmatprep.mubr.bf16.mxu0 0
    %1313 = vmatmul.mubr.bf16.gmra.mrb[0].mxu0 %v1270
    %v1314 = vpop.f32.mrb[0].mxu0
    %v1315 = vadd.f32 0.0, %v1314
    %v1316 = vpop.f32.mrb[0].mxu0
    %v1317 = vpop.f32.mrb[0].mxu0
    %v1318 = vadd.f32 0.0, %v1317
    %v1319 = vpop.f32.mrb[0].mxu0
    %1320 = vdwg.mxu0
    %v1322 = vsel %vm1171, %v1262, 0
    %v1325 = vsel %vm1171, %v1263, 0
    %1327 = vmatprep.subr.bf16.mxu0 0
    %1328 = vmatpush1.bf16.msra.mxu0 %v1265
    %1329 = vmatprep.subr.bf16.mxu0 0
    %1330 = vmatpush1.bf16.msra.mxu0 0
    %1331 = vmatprep.subr.bf16.mxu0 0
    %1332 = vmatpush1.bf16.msra.mxu0 0
    %1333 = vmatprep.subr.bf16.mxu0 0
    %1334 = vmatpush1.bf16.msra.mxu0 0
    %1335 = vmatprep.subr.bf16.mxu0 0
    %1336 = vmatpush1.bf16.msra.mxu0 0
    %1337 = vmatprep.subr.bf16.mxu0 0
    %1338 = vmatpush1.bf16.msra.mxu0 0
    %1339 = vmatprep.subr.bf16.mxu0 0
    %1340 = vmatpush1.bf16.msra.mxu0 0
    %1341 = vmatprep.subr.bf16.mxu0 0
    %1342 = vmatpush1.bf16.msra.mxu0 0
    %1343 = vmatprep.subr.bf16.mxu0 0
    %1344 = vmatpush1.bf16.msra.mxu0 0
    %1345 = vmatprep.subr.bf16.mxu0 0
    %1346 = vmatpush1.bf16.msra.mxu0 0
    %1347 = vmatprep.subr.bf16.mxu0 0
    %1348 = vmatpush1.bf16.msra.mxu0 0
    %1349 = vmatprep.subr.bf16.mxu0 0
    %1350 = vmatpush1.bf16.msra.mxu0 0
    %1351 = vmatprep.subr.bf16.mxu0 0
    %1352 = vmatpush1.bf16.msra.mxu0 0
    %1353 = vmatprep.subr.bf16.mxu0 0
    %1354 = vmatpush1.bf16.msra.mxu0 0
    %1355 = vmatprep.subr.bf16.mxu0 0
    %1356 = vmatpush1.bf16.msra.mxu0 0
    %1357 = vmatprep.subr.bf16.mxu0 0
    %1358 = vmatpush1.bf16.msra.mxu0 0
    %1359 = vmatprep.mubr.bf16.mxu0 0
    %1360 = vmatmul.mubr.bf16.gmra.mrb[0].mxu0 %v1322
    %v1361 = vpop.f32.mrb[0].mxu0
    %v1362 = vadd.f32 0.0, %v1361
    %v1363 = vpop.f32.mrb[0].mxu0
    %v1364 = vpop.f32.mrb[0].mxu0
    %v1365 = vadd.f32 0.0, %v1364
    %v1366 = vpop.f32.mrb[0].mxu0
    %1367 = vmatprep.mubr.bf16.mxu0 0
    %1368 = vmatmul.mubr.bf16.gmra.mrb[0].mxu0 %v1325
    %v1369 = vpop.f32.mrb[0].mxu0
    %v1370 = vadd.f32 0.0, %v1369
    %v1371 = vpop.f32.mrb[0].mxu0
    %v1372 = vpop.f32.mrb[0].mxu0
    %v1373 = vadd.f32 0.0, %v1372
    %v1374 = vpop.f32.mrb[0].mxu0
    %1375 = vdwg.mxu0
    %v1376 = vcombine.low %v1307, %v1362
    %v1377 = vcombine.high %v1307, %v1362
    %v1379 = vunpack.c.l.s4 1983009808
    %v1380 = vunpack.c.0.s8 %v1379
    %v1381 = vlaneseq
    %v1382 = vshrl.u32 %v1381, 7
    %v1383 = vsub.s32 %v1380, %v1382
    %v1384 = vrot.slane %v1376, %v1383
    %v1386 = vunpack.c.l.s4 1983009808
    %v1387 = vunpack.c.0.s8 %v1386
    %v1388 = vlaneseq
    %v1389 = vshrl.u32 %v1388, 7
    %v1390 = vsub.s32 %v1387, %v1389
    %v1391 = vrot.slane %v1377, %v1390
    %v1392 = vcombine.low %v1315, %v1370
    %v1393 = vcombine.high %v1315, %v1370
    %v1395 = vunpack.c.l.s4 1983009808
    %v1396 = vunpack.c.0.s8 %v1395
    %v1397 = vlaneseq
    %v1398 = vshrl.u32 %v1397, 7
    %v1399 = vsub.s32 %v1396, %v1398
    %v1400 = vrot.slane %v1392, %v1399
    %v1402 = vunpack.c.l.s4 1983009808
    %v1403 = vunpack.c.0.s8 %v1402
    %v1404 = vlaneseq
    %v1405 = vshrl.u32 %v1404, 7
    %v1406 = vsub.s32 %v1403, %v1405
    %v1407 = vrot.slane %v1393, %v1406
    %v1408 = vcombine.low %v1384, %v1400
    %v1409 = vcombine.high %v1384, %v1400
    %v1411 = vunpack.c.l.s4 1934713408
    %v1412 = vunpack.c.0.s8 %v1411
    %v1413 = vlaneseq
    %v1414 = vshrl.u32 %v1413, 7
    %v1415 = vsub.s32 %v1412, %v1414
    %v1416 = vrot.slane %v1408, %v1415
    %v1418 = vunpack.c.l.s4 1934713408
    %v1419 = vunpack.c.0.s8 %v1418
    %v1420 = vlaneseq
    %v1421 = vshrl.u32 %v1420, 7
    %v1422 = vsub.s32 %v1419, %v1421
    %v1423 = vrot.slane %v1409, %v1422
    %v1424 = vcombine.low %v1391, %v1407
    %v1425 = vcombine.high %v1391, %v1407
    %v1427 = vunpack.c.l.s4 1934713408
    %v1428 = vunpack.c.0.s8 %v1427
    %v1429 = vlaneseq
    %v1430 = vshrl.u32 %v1429, 7
    %v1431 = vsub.s32 %v1428, %v1430
    %v1432 = vrot.slane %v1424, %v1431
    %v1434 = vunpack.c.l.s4 1934713408
    %v1435 = vunpack.c.0.s8 %v1434
    %v1436 = vlaneseq
    %v1437 = vshrl.u32 %v1436, 7
    %v1438 = vsub.s32 %v1435, %v1437
    %v1439 = vrot.slane %v1425, %v1438
    %v1440 = vcombine.high %v1416, 0.0
    %v1441 = vcombine.high %v1423, 0.0
    %v1442 = vcombine.high %v1432, 0.0
    %v1443 = vcombine.high %v1439, 0.0
    %v1444 = vcombine.low %v1310, %v1365
    %v1445 = vcombine.high %v1310, %v1365
    %v1447 = vunpack.c.l.s4 1983009808
    %v1448 = vunpack.c.0.s8 %v1447
    %v1449 = vlaneseq
    %v1450 = vshrl.u32 %v1449, 7
    %v1451 = vsub.s32 %v1448, %v1450
    %v1452 = vrot.slane %v1444, %v1451
    %v1454 = vunpack.c.l.s4 1983009808
    %v1455 = vunpack.c.0.s8 %v1454
    %v1456 = vlaneseq
    %v1457 = vshrl.u32 %v1456, 7
    %v1458 = vsub.s32 %v1455, %v1457
    %v1459 = vrot.slane %v1445, %v1458
    %v1460 = vcombine.low %v1318, %v1373
    %v1461 = vcombine.high %v1318, %v1373
    %v1463 = vunpack.c.l.s4 1983009808
    %v1464 = vunpack.c.0.s8 %v1463
    %v1465 = vlaneseq
    %v1466 = vshrl.u32 %v1465, 7
    %v1467 = vsub.s32 %v1464, %v1466
    %v1468 = vrot.slane %v1460, %v1467
    %v1470 = vunpack.c.l.s4 1983009808
    %v1471 = vunpack.c.0.s8 %v1470
    %v1472 = vlaneseq
    %v1473 = vshrl.u32 %v1472, 7
    %v1474 = vsub.s32 %v1471, %v1473
    %v1475 = vrot.slane %v1461, %v1474
    %v1476 = vcombine.low %v1452, %v1468
    %v1477 = vcombine.high %v1452, %v1468
    %v1479 = vunpack.c.l.s4 1934713408
    %v1480 = vunpack.c.0.s8 %v1479
    %v1481 = vlaneseq
    %v1482 = vshrl.u32 %v1481, 7
    %v1483 = vsub.s32 %v1480, %v1482
    %v1484 = vrot.slane %v1476, %v1483
    %v1486 = vunpack.c.l.s4 1934713408
    %v1487 = vunpack.c.0.s8 %v1486
    %v1488 = vlaneseq
    %v1489 = vshrl.u32 %v1488, 7
    %v1490 = vsub.s32 %v1487, %v1489
    %v1491 = vrot.slane %v1477, %v1490
    %v1492 = vcombine.low %v1459, %v1475
    %v1493 = vcombine.high %v1459, %v1475
    %v1495 = vunpack.c.l.s4 1934713408
    %v1496 = vunpack.c.0.s8 %v1495
    %v1497 = vlaneseq
    %v1498 = vshrl.u32 %v1497, 7
    %v1499 = vsub.s32 %v1496, %v1498
    %v1500 = vrot.slane %v1492, %v1499
    %v1502 = vunpack.c.l.s4 1934713408
    %v1503 = vunpack.c.0.s8 %v1502
    %v1504 = vlaneseq
    %v1505 = vshrl.u32 %v1504, 7
    %v1506 = vsub.s32 %v1503, %v1505
    %v1507 = vrot.slane %v1493, %v1506
    %v1508 = vcombine.high %v1484, 0.0
    %v1509 = vcombine.high %v1491, 0.0
    %v1510 = vcombine.high %v1500, 0.0
    %v1511 = vcombine.high %v1507, 0.0
    %v1512 = vcombine.low %v1416, %v1423
    %v1514 = vunpack.c.l.s4 1983009808
    %v1515 = vunpack.c.0.s8 %v1514
    %v1516 = vlaneseq
    %v1517 = vshrl.u32 %v1516, 7
    %v1518 = vsub.s32 %v1515, %v1517
    %v1519 = vrot.slane %v1512, %v1518
    %v1520 = vcombine.low %v1440, %v1441
    %v1522 = vunpack.c.l.s4 1983009808
    %v1523 = vunpack.c.0.s8 %v1522
    %v1524 = vlaneseq
    %v1525 = vshrl.u32 %v1524, 7
    %v1526 = vsub.s32 %v1523, %v1525
    %v1527 = vrot.slane %v1520, %v1526
    %v1528 = vcombine.low %v1432, %v1439
    %v1530 = vunpack.c.l.s4 1983009808
    %v1531 = vunpack.c.0.s8 %v1530
    %v1532 = vlaneseq
    %v1533 = vshrl.u32 %v1532, 7
    %v1534 = vsub.s32 %v1531, %v1533
    %v1535 = vrot.slane %v1528, %v1534
    %v1536 = vcombine.low %v1442, %v1443
    %v1538 = vunpack.c.l.s4 1983009808
    %v1539 = vunpack.c.0.s8 %v1538
    %v1540 = vlaneseq
    %v1541 = vshrl.u32 %v1540, 7
    %v1542 = vsub.s32 %v1539, %v1541
    %v1543 = vrot.slane %v1536, %v1542
    %v1544 = vcombine.low %v1519, %v1527
    %v1545 = vcombine.high %v1519, %v1527
    %v1547 = vunpack.c.l.s4 1934713408
    %v1548 = vunpack.c.0.s8 %v1547
    %v1549 = vlaneseq
    %v1550 = vshrl.u32 %v1549, 7
    %v1551 = vsub.s32 %v1548, %v1550
    %v1552 = vrot.slane %v1544, %v1551
    %v1554 = vunpack.c.l.s4 1934713408
    %v1555 = vunpack.c.0.s8 %v1554
    %v1556 = vlaneseq
    %v1557 = vshrl.u32 %v1556, 7
    %v1558 = vsub.s32 %v1555, %v1557
    %v1559 = vrot.slane %v1545, %v1558
    %v1560 = vcombine.low %v1535, %v1543
    %v1561 = vcombine.high %v1535, %v1543
    %v1563 = vunpack.c.l.s4 1934713408
    %v1564 = vunpack.c.0.s8 %v1563
    %v1565 = vlaneseq
    %v1566 = vshrl.u32 %v1565, 7
    %v1567 = vsub.s32 %v1564, %v1566
    %v1568 = vrot.slane %v1560, %v1567
    %v1570 = vunpack.c.l.s4 1934713408
    %v1571 = vunpack.c.0.s8 %v1570
    %v1572 = vlaneseq
    %v1573 = vshrl.u32 %v1572, 7
    %v1574 = vsub.s32 %v1571, %v1573
    %v1575 = vrot.slane %v1561, %v1574
    %v1576 = vcombine.low %v1552, %v1568
    %v1577 = vcombine.high %v1552, %v1568
    %v1578 = vcombine.low %v1559, %v1575
    %v1579 = vcombine.high %v1559, %v1575
    %v1580 = vcombine.low %v1484, %v1491
    %v1582 = vunpack.c.l.s4 1983009808
    %v1583 = vunpack.c.0.s8 %v1582
    %v1584 = vlaneseq
    %v1585 = vshrl.u32 %v1584, 7
    %v1586 = vsub.s32 %v1583, %v1585
    %v1587 = vrot.slane %v1580, %v1586
    %v1588 = vcombine.low %v1508, %v1509
    %v1590 = vunpack.c.l.s4 1983009808
    %v1591 = vunpack.c.0.s8 %v1590
    %v1592 = vlaneseq
    %v1593 = vshrl.u32 %v1592, 7
    %v1594 = vsub.s32 %v1591, %v1593
    %v1595 = vrot.slane %v1588, %v1594
    %v1596 = vcombine.low %v1500, %v1507
    %v1598 = vunpack.c.l.s4 1983009808
    %v1599 = vunpack.c.0.s8 %v1598
    %v1600 = vlaneseq
    %v1601 = vshrl.u32 %v1600, 7
    %v1602 = vsub.s32 %v1599, %v1601
    %v1603 = vrot.slane %v1596, %v1602
    %v1604 = vcombine.low %v1510, %v1511
    %v1606 = vunpack.c.l.s4 1983009808
    %v1607 = vunpack.c.0.s8 %v1606
    %v1608 = vlaneseq
    %v1609 = vshrl.u32 %v1608, 7
    %v1610 = vsub.s32 %v1607, %v1609
    %v1611 = vrot.slane %v1604, %v1610
    %v1612 = vcombine.low %v1587, %v1595
    %v1613 = vcombine.high %v1587, %v1595
    %v1615 = vunpack.c.l.s4 1934713408
    %v1616 = vunpack.c.0.s8 %v1615
    %v1617 = vlaneseq
    %v1618 = vshrl.u32 %v1617, 7
    %v1619 = vsub.s32 %v1616, %v1618
    %v1620 = vrot.slane %v1612, %v1619
    %v1622 = vunpack.c.l.s4 1934713408
    %v1623 = vunpack.c.0.s8 %v1622
    %v1624 = vlaneseq
    %v1625 = vshrl.u32 %v1624, 7
    %v1626 = vsub.s32 %v1623, %v1625
    %v1627 = vrot.slane %v1613, %v1626
    %v1628 = vcombine.low %v1603, %v1611
    %v1629 = vcombine.high %v1603, %v1611
    %v1631 = vunpack.c.l.s4 1934713408
    %v1632 = vunpack.c.0.s8 %v1631
    %v1633 = vlaneseq
    %v1634 = vshrl.u32 %v1633, 7
    %v1635 = vsub.s32 %v1632, %v1634
    %v1636 = vrot.slane %v1628, %v1635
    %v1638 = vunpack.c.l.s4 1934713408
    %v1639 = vunpack.c.0.s8 %v1638
    %v1640 = vlaneseq
    %v1641 = vshrl.u32 %v1640, 7
    %v1642 = vsub.s32 %v1639, %v1641
    %v1643 = vrot.slane %v1629, %v1642
    %v1644 = vcombine.low %v1620, %v1636
    %v1645 = vcombine.high %v1620, %v1636
    %v1646 = vcombine.low %v1627, %v1643
    %v1647 = vcombine.high %v1627, %v1643
    %1650 = vrot.lane.b32.xlu0 %v1577, 8
    %v1651 = vpop.permute.xlu0 %1650
    %1652 = vrot.lane.b32.xlu0 %v1645, 8
    %v1653 = vpop.permute.xlu0 %1652
    %1658 = vrot.lane.b32.xlu0 %v1578, 16
    %v1659 = vpop.permute.xlu0 %1658
    %1660 = vrot.lane.b32.xlu0 %v1646, 16
    %v1661 = vpop.permute.xlu0 %1660
    %1666 = vrot.lane.b32.xlu0 %v1579, 24
    %v1667 = vpop.permute.xlu0 %1666
    %1668 = vrot.lane.b32.xlu0 %v1647, 24
    %v1669 = vpop.permute.xlu0 %1668
    %v1672 = vsel %vm1054, %v1576, %v1651
    %v1673 = vsel %vm1054, %v1644, %v1653
    %v1674 = vsel %vm1171, %v1672, %v1659
    %v1675 = vsel %vm1171, %v1673, %v1661
    %vm1676 = vcmask 195584
    %v1677 = vsel %vm1676, %v1674, %v1667
    %v1678 = vsel %vm1676, %v1675, %v1669
    %v1679 = vpack.c.bf16 %v1678, %v1677
    %v1680 = vld [vmem:[%s2] sm:$0xf]
    %v1681 = vld [vmem:[%s2 + $0x4] sm:$0xf]
    %v1682 = vld [vmem:[%s2 + $0x8] sm:$0xf]
    %v1683 = vld [vmem:[%s2 + $0xc] sm:$0xf]
    %v1688 = vunpack.c.l.b16 %v1680
    %v1689 = vunpack.c.l.b16 %v1681
    %v1690 = vunpack.c.l.b16 %v1682
    %v1691 = vunpack.c.l.b16 %v1683
    %v1692 = vpack.c.b16 %v1689, %v1688
    %v1693 = vpack.c.b16 %v1691, %v1690
    %v1697 = vsel %vm42, %v1679, 0
    %1699 = vmatprep.subr.bf16.mxu0 0
    %1700 = vmatpush1.bf16.msra.mxu0 %v1692
    %1701 = vmatprep.subr.bf16.mxu0 0
    %1702 = vmatpush1.bf16.msra.mxu0 %v1693
    %1703 = vmatprep.subr.bf16.mxu0 0
    %1704 = vmatpush1.bf16.msra.mxu0 0
    %1705 = vmatprep.subr.bf16.mxu0 0
    %1706 = vmatpush1.bf16.msra.mxu0 0
    %1707 = vmatprep.subr.bf16.mxu0 0
    %1708 = vmatpush1.bf16.msra.mxu0 0
    %1709 = vmatprep.subr.bf16.mxu0 0
    %1710 = vmatpush1.bf16.msra.mxu0 0
    %1711 = vmatprep.subr.bf16.mxu0 0
    %1712 = vmatpush1.bf16.msra.mxu0 0
    %1713 = vmatprep.subr.bf16.mxu0 0
    %1714 = vmatpush1.bf16.msra.mxu0 0
    %1715 = vmatprep.subr.bf16.mxu0 0
    %1716 = vmatpush1.bf16.msra.mxu0 0
    %1717 = vmatprep.subr.bf16.mxu0 0
    %1718 = vmatpush1.bf16.msra.mxu0 0
    %1719 = vmatprep.subr.bf16.mxu0 0
    %1720 = vmatpush1.bf16.msra.mxu0 0
    %1721 = vmatprep.subr.bf16.mxu0 0
    %1722 = vmatpush1.bf16.msra.mxu0 0
    %1723 = vmatprep.subr.bf16.mxu0 0
    %1724 = vmatpush1.bf16.msra.mxu0 0
    %1725 = vmatprep.subr.bf16.mxu0 0
    %1726 = vmatpush1.bf16.msra.mxu0 0
    %1727 = vmatprep.subr.bf16.mxu0 0
    %1728 = vmatpush1.bf16.msra.mxu0 0
    %1729 = vmatprep.subr.bf16.mxu0 0
    %1730 = vmatpush1.bf16.msra.mxu0 0
    %1731 = vmatprep.mubr.bf16.mxu0 0
    %1732 = vmatmul.mubr.bf16.gmra.mrb[0].mxu0 %v1697
    %v1733 = vpop.f32.mrb[0].mxu0
    %v1734 = vadd.f32 0.0, %v1733
    %v1735 = vpop.f32.mrb[0].mxu0
    %v1736 = vpop.f32.mrb[0].mxu0
    %v1737 = vadd.f32 0.0, %v1736
    %v1738 = vpop.f32.mrb[0].mxu0
    %1739 = vdwg.mxu0
    %v1740 = vadd.f32 %v37, %v1734
    %v1741 = vadd.f32 %v38, %v1737
    %v1742 = vld [vmem:[%s6] sm:$0x1]
    %v1743 = vmul.f32 %v1740, %v1740
    %v1744 = vmul.f32 %v1741, %v1741
    %v1745 = vsel %vm42, %v1743, 0.0
    %1746 = vadd.xlane.f32.xlu0 %v1745
    %v1747 = vpop.xlane.xlu0 %1746
    %v1748 = vsel %vm42, %v1744, 0.0
    %1749 = vadd.xlane.f32.xlu0 %v1748
    %v1750 = vpop.xlane.xlu0 %1749
    %v1751 = vmul.f32 %v1747, %v49
    %v1752 = vmul.f32 %v1750, %v49
    %v1753 = vadd.f32 %v1751, 1e-06
    %v1754 = vadd.f32 %v1752, 1e-06
    %v1755 = vrsqrt.pop %v1753
    %v1756 = vrsqrt.pop %v1754
    %v1757 = vmul.f32 %v1740, %v1755
    %v1758 = vmul.f32 %v1741, %v1756
    %v1760 = vlaneseq
    %v1761 = vshrl.u32 %v1760, 7
    %v1762 = vsub.s32 0, %v1761
    %v1763 = vrot.slane %v1742, %v1762
    %v1765 = vmul.f32 %v1757, %v1763
    %v1766 = vmul.f32 %v1758, %v1763
    %v1767 = vpack.c.bf16 %v1766, %v1765
    %v1768 = vld [vmem:[%s3] sm:$0xf]
    %v1769 = vld [vmem:[%s3 + $0x4] sm:$0xf]
    %v1770 = vld [vmem:[%s3 + $0x8] sm:$0xf]
    %v1771 = vld [vmem:[%s3 + $0xc] sm:$0xf]
    %v1776 = vunpack.c.l.b16 %v1768
    %v1777 = vunpack.c.l.b16 %v1769
    %v1778 = vunpack.c.l.b16 %v1770
    %v1779 = vunpack.c.l.b16 %v1771
    %v1780 = vpack.c.b16 %v1777, %v1776
    %v1781 = vpack.c.b16 %v1779, %v1778
    %v1785 = vsel %vm42, %v1767, 0
    %1787 = vmatprep.subr.bf16.mxu0 0
    %1788 = vmatpush1.bf16.msra.mxu0 %v1780
    %1789 = vmatprep.subr.bf16.mxu0 0
    %1790 = vmatpush1.bf16.msra.mxu0 %v1781
    %1791 = vmatprep.subr.bf16.mxu0 0
    %1792 = vmatpush1.bf16.msra.mxu0 0
    %1793 = vmatprep.subr.bf16.mxu0 0
    %1794 = vmatpush1.bf16.msra.mxu0 0
    %1795 = vmatprep.subr.bf16.mxu0 0
    %1796 = vmatpush1.bf16.msra.mxu0 0
    %1797 = vmatprep.subr.bf16.mxu0 0
    %1798 = vmatpush1.bf16.msra.mxu0 0
    %1799 = vmatprep.subr.bf16.mxu0 0
    %1800 = vmatpush1.bf16.msra.mxu0 0
    %1801 = vmatprep.subr.bf16.mxu0 0
    %1802 = vmatpush1.bf16.msra.mxu0 0
    %1803 = vmatprep.subr.bf16.mxu0 0
    %1804 = vmatpush1.bf16.msra.mxu0 0
    %1805 = vmatprep.subr.bf16.mxu0 0
    %1806 = vmatpush1.bf16.msra.mxu0 0
    %1807 = vmatprep.subr.bf16.mxu0 0
    %1808 = vmatpush1.bf16.msra.mxu0 0
    %1809 = vmatprep.subr.bf16.mxu0 0
    %1810 = vmatpush1.bf16.msra.mxu0 0
    %1811 = vmatprep.subr.bf16.mxu0 0
    %1812 = vmatpush1.bf16.msra.mxu0 0
    %1813 = vmatprep.subr.bf16.mxu0 0
    %1814 = vmatpush1.bf16.msra.mxu0 0
    %1815 = vmatprep.subr.bf16.mxu0 0
    %1816 = vmatpush1.bf16.msra.mxu0 0
    %1817 = vmatprep.subr.bf16.mxu0 0
    %1818 = vmatpush1.bf16.msra.mxu0 0
    %1819 = vmatprep.mubr.bf16.mxu0 0
    %1820 = vmatmul.mubr.bf16.gmra.mrb[0].mxu0 %v1785
    %v1821 = vpop.f32.mrb[0].mxu0
    %v1822 = vadd.f32 0.0, %v1821
    %v1823 = vpop.f32.mrb[0].mxu0
    %v1824 = vpop.f32.mrb[0].mxu0
    %v1825 = vadd.f32 0.0, %v1824
    %v1826 = vpop.f32.mrb[0].mxu0
    %1827 = vdwg.mxu0
    %v1828 = vxor.u32 %v1822, 2147483648
    %v1829 = vxor.u32 %v1825, 2147483648
    %v1830 = vmul.f32 %v1828, 1.442695
    %v1831 = vpow.pop %v1830
    %v1832 = vmul.f32 %v1829, 1.442695
    %v1833 = vpow.pop %v1832
    %v1834 = vadd.f32 %v1831, 1.0
    %v1835 = vadd.f32 %v1833, 1.0
    %v1836 = vrcp.pop %v1834
    %v1837 = vmul.f32 1.0, %v1836
    %v1838 = vrcp.pop %v1835
    %v1839 = vmul.f32 1.0, %v1838
    %v1840 = vmul.f32 %v1822, %v1837
    %v1841 = vmul.f32 %v1825, %v1839
    %1844 = vrot.lane.b32.xlu0 %v1840, 64
    %v1845 = vpop.permute.xlu0 %1844
    %1846 = vrot.lane.b32.xlu0 %v1841, 64
    %v1847 = vpop.permute.xlu0 %1846
    %v1850 = vmul.f32 %v1822, %v1845
    %v1851 = vmul.f32 %v1825, %v1847
    %v1852 = vpack.c.bf16 %v1851, %v1850
    %v1853 = vld [vmem:[%s4] sm:$0xf]
    %v1854 = vld [vmem:[%s4 + $0x4] sm:$0xf]
    %v1855 = vld [vmem:[%s4 + $0x8] sm:$0xf]
    %v1856 = vld [vmem:[%s4 + $0xc] sm:$0xf]
    %v1857 = vld [vmem:[%s4 + $0x10] sm:$0xf]
    %v1858 = vld [vmem:[%s4 + $0x14] sm:$0xf]
    %v1859 = vld [vmem:[%s4 + $0x18] sm:$0xf]
    %v1860 = vld [vmem:[%s4 + $0x1c] sm:$0xf]
    %1862 = vrot.lane.b32.xlu0 %v1852, 64
    %v1863 = vpop.permute.xlu0 %1862
    %v1872 = vunpack.c.l.b16 %v1853
    %v1873 = vunpack.c.l.b16 %v1854
    %v1874 = vunpack.c.l.b16 %v1855
    %v1875 = vunpack.c.l.b16 %v1856
    %v1876 = vunpack.c.l.b16 %v1857
    %v1877 = vunpack.c.l.b16 %v1858
    %v1878 = vunpack.c.l.b16 %v1859
    %v1879 = vunpack.c.l.b16 %v1860
    %v1880 = vpack.c.b16 %v1873, %v1872
    %v1881 = vpack.c.b16 %v1875, %v1874
    %v1882 = vpack.c.b16 %v1877, %v1876
    %v1883 = vpack.c.b16 %v1879, %v1878
    %vm1888 = vcmask 523264
    %v1890 = vsel %vm1888, %v1863, 0
    %1892 = vmatprep.subr.bf16.mxu0 0
    %1893 = vmatpush1.bf16.msra.mxu0 %v1880
    %1894 = vmatprep.subr.bf16.mxu0 0
    %1895 = vmatpush1.bf16.msra.mxu0 %v1881
    %1896 = vmatprep.subr.bf16.mxu0 0
    %1897 = vmatpush1.bf16.msra.mxu0 %v1882
    %1898 = vmatprep.subr.bf16.mxu0 0
    %1899 = vmatpush1.bf16.msra.mxu0 %v1883
    %1900 = vmatprep.subr.bf16.mxu0 0
    %1901 = vmatpush1.bf16.msra.mxu0 0
    %1902 = vmatprep.subr.bf16.mxu0 0
    %1903 = vmatpush1.bf16.msra.mxu0 0
    %1904 = vmatprep.subr.bf16.mxu0 0
    %1905 = vmatpush1.bf16.msra.mxu0 0
    %1906 = vmatprep.subr.bf16.mxu0 0
    %1907 = vmatpush1.bf16.msra.mxu0 0
    %1908 = vmatprep.subr.bf16.mxu0 0
    %1909 = vmatpush1.bf16.msra.mxu0 0
    %1910 = vmatprep.subr.bf16.mxu0 0
    %1911 = vmatpush1.bf16.msra.mxu0 0
    %1912 = vmatprep.subr.bf16.mxu0 0
    %1913 = vmatpush1.bf16.msra.mxu0 0
    %1914 = vmatprep.subr.bf16.mxu0 0
    %1915 = vmatpush1.bf16.msra.mxu0 0
    %1916 = vmatprep.subr.bf16.mxu0 0
    %1917 = vmatpush1.bf16.msra.mxu0 0
    %1918 = vmatprep.subr.bf16.mxu0 0
    %1919 = vmatpush1.bf16.msra.mxu0 0
    %1920 = vmatprep.subr.bf16.mxu0 0
    %1921 = vmatpush1.bf16.msra.mxu0 0
    %1922 = vmatprep.subr.bf16.mxu0 0
    %1923 = vmatpush1.bf16.msra.mxu0 0
    %1924 = vmatprep.mubr.bf16.mxu0 0
    %1925 = vmatmul.mubr.bf16.gmra.mrb[0].mxu0 %v1890
    %v1926 = vpop.f32.mrb[0].mxu0
    %v1927 = vadd.f32 0.0, %v1926
    %v1928 = vpop.f32.mrb[0].mxu0
    %v1929 = vpop.f32.mrb[0].mxu0
    %v1930 = vadd.f32 0.0, %v1929
    %v1931 = vpop.f32.mrb[0].mxu0
    %1932 = vdwg.mxu0
    %v1933 = vadd.f32 %v1740, %v1927
    %v1934 = vadd.f32 %v1741, %v1930
    %1935 = vst.msk [vmem:[#allocation2] sm:$0xff] %vm42, %v1933
    %1936 = vst.msk [vmem:[#allocation2 + $0x8] sm:$0xff] %vm42, %v1934
    // Predicated region
    $region42: #{phi3_decoder_layer.1} parent=1 // pred_check
      _
    $region43: #{phi3_decoder_layer.1} parent=1 // pred_check_branch
      %1938 = sbr.rel (0) target = $region45
    $region44: #{phi3_decoder_layer.1} parent=1 // pred_region
      %s1940 = ssub.s32 256, 256
      %1941 = vsyncadd [#allocation3], %s1940
      %s1942 = sshll.u32 [#allocation2], 4
      %s1943 = int_to_ptr.vmem [resolvable:$true] %s1942
      %1948 = dma.vmem_to_hbm [thread:$0]  %s1943, 256, %s10, [#allocation3], 128, 128, 8
    $region45: #{phi3_decoder_layer.1} parent=1 // pred_fallthru
      _
    // Predicated region
    $region46: #{phi3_decoder_layer.1} parent=1 // pred_check
      _
    $region47: #{phi3_decoder_layer.1} parent=1 // pred_check_branch
      %1950 = sbr.rel (0) target = $region49
    $region48: #{phi3_decoder_layer.1} parent=1 // pred_region
      %1951 = dma.done [#allocation3], 256
    $region49: #{phi3_decoder_layer.1} parent=1 // pred_fallthru
      _
    %1952 = vsyncpa [#allocation3], 1

</llo_original>
